<compile_context>
chip_gen: v6e
topology: v6e:2x2x1
jax: 0.10.0
libtpu: 0.0.40
codegen_flags: <defaults>
</compile_context>

<pallas_src>
import jax
import jax.numpy as jnp
from jax.experimental import pallas as pl
from jax.experimental.pallas import tpu as pltpu

DEC_DIM = 32        # GRU hidden size
DEC_INPUT_DIM = 4   # GRU input size (no embedding layer under this config)
NUM_STEPS = 12      # torch loop: for i in range(1, 13)


def decoder_kernel(y_ref, h0_ref, w_ih_ref, w_hh_ref, w_big_ref,
                   a1_bias_ref, a_bias_ref, b_hh_n_ref, w_fc_ref, b_fc_ref,
                   out_ref):
    """All refs live in VMEM; the whole 12-step recurrence runs in one kernel.

    y_ref:    (T, B, 4)   time-major teacher-forcing sequence (T >= 12)
    h0_ref:   (B, 32)     initial hidden state
    w_ih:     (4, 96)     GRU input weights  (transposed, gates [r|z|n])
    w_hh:     (32, 96)    GRU hidden weights (transposed) -- used for step 1
    w_big:    (32, 128)   fused hidden weights for steps 2..12:
                          [Whh_r+fb_r | Whh_z+fb_z | Whh_n | fb_n],
                          fb = w_fc @ w_ih[3:4, :]
    a1_bias:  (1, 96)     b_ih + [b_hh_r | b_hh_z | 0]            (step 1)
    a_bias:   (1, 96)     b_ih + b_fc*w_ih[3,:] + [b_hh_rz | 0]   (steps 2..12)
    b_hh_n:   (1, 32)     n-gate hidden bias (must stay inside the r* product)
    w_fc:     (32, 1), b_fc: (1, 1)
    out_ref:  (12*B, 1)   row t*B + b = prediction of step t+1 for batch b
    """
    H = DEC_DIM
    B = h0_ref.shape[0]
    b_hh_n = b_hh_n_ref[...]
    w_ih = w_ih_ref[...]

    # TODO(synk): nn.Dropout(p=0.5) is treated as identity (eval mode);
    # training-mode dropout would need pltpu.prng_seed/prng_random_bits.

    # ---- hoisted input-path work (off the serial dependency chain) ----------
    # step 1 input: y_[0] with NaN -> 0 (full 4 features).
    x1 = y_ref[0]
    x1 = jnp.where(x1 != x1, jnp.zeros_like(x1), x1)
    a1 = (jnp.dot(x1, w_ih, preferred_element_type=jnp.float32)
          + a1_bias_ref[...])                                        # (B, 96)

    # steps 2..12: teacher-forcing features y_[i-1][:, 1:4] -> ONE MXU call.
    feat = jnp.concatenate(
        [y_ref[i][:, 1:] for i in range(1, NUM_STEPS)], axis=0)      # (11B, 3)
    a_slab = (jnp.dot(feat, w_ih[:3, :], preferred_element_type=jnp.float32)
              + a_bias_ref[...])                                     # (11B, 96)

    def gru_step(a, g, g_fb, h_prev):
        # a: (B,96) precomputed input+bias part; g: (B,96) hidden-path gates;
        # g_fb: (B,32) n-gate feedback part (0.0 for step 1); h_prev: (B,32).
        r = jax.nn.sigmoid(a[:, 0 * H:1 * H] + g[:, 0 * H:1 * H])
        z = jax.nn.sigmoid(a[:, 1 * H:2 * H] + g[:, 1 * H:2 * H])
        n = jnp.tanh(a[:, 2 * H:3 * H] + g_fb + r * (g[:, 2 * H:3 * H] + b_hh_n))
        return (1.0 - z) * n + z * h_prev   # output == hidden (torch assert)

    # ---- step 1 (unfused hidden weights: no fc feedback in its input) -------
    h = h0_ref[...]
    g1 = jnp.dot(h, w_hh_ref[...], preferred_element_type=jnp.float32)  # (B,96)
    h = gru_step(a1, g1, 0.0, h)
    hs = [h]

    # ---- steps 2..12: one (B,32)@(32,128) MXU dot per serial step -----------
    w_big = w_big_ref[...]
    for i in range(2, NUM_STEPS + 1):
        g = jnp.dot(h, w_big, preferred_element_type=jnp.float32)       # (B,128)
        a_i = a_slab[(i - 2) * B:(i - 1) * B, :]
        h = gru_step(a_i, g[:, :3 * H], g[:, 3 * H:4 * H], h)
        hs.append(h)

    # ---- fc head: ONE (12B,32)@(32,1) dot + a single store ------------------
    h_all = jnp.concatenate(hs, axis=0)                                  # (12B,32)
    out_ref[...] = (jnp.dot(h_all, w_fc_ref[...],
                            preferred_element_type=jnp.float32)
                    + b_fc_ref[...])                                     # (12B,1)


def init_params(key):
    """Deterministic GRU / Linear params, PyTorch-style uniform init."""
    H, D = DEC_DIM, DEC_INPUT_DIM
    k = 1.0 / jnp.sqrt(H)
    ks = jax.random.split(key, 6)
    w_ih = jax.random.uniform(ks[0], (D, 3 * H), jnp.float32, -k, k)
    w_hh = jax.random.uniform(ks[1], (H, 3 * H), jnp.float32, -k, k)
    b_ih = jax.random.uniform(ks[2], (1, 3 * H), jnp.float32, -k, k)
    b_hh = jax.random.uniform(ks[3], (1, 3 * H), jnp.float32, -k, k)
    w_fc = jax.random.uniform(ks[4], (H, 1), jnp.float32, -k, k)
    b_fc = jax.random.uniform(ks[5], (1, 1), jnp.float32, -k, k)
    return (w_ih, w_hh, b_ih, b_hh, w_fc, b_fc)


def fold_params(params):
    """One-time algebraic folds (review opts #2 and #4), done in the wrapper."""
    w_ih, w_hh, b_ih, b_hh, w_fc, b_fc = params
    H = DEC_DIM
    w_fb = jnp.dot(w_fc, w_ih[3:4, :])                       # (32, 96) feedback fold
    w_big = jnp.concatenate(
        [w_hh[:, :2 * H] + w_fb[:, :2 * H],                  # r, z: direct sum -> fuse
         w_hh[:, 2 * H:],                                    # n: hidden part (gets r*)
         w_fb[:, 2 * H:]], axis=1)                           # n: feedback part (no r*)
    bhh_rz0 = jnp.concatenate([b_hh[:, :2 * H],
                               jnp.zeros((1, H), jnp.float32)], axis=1)
    a1_bias = b_ih + bhh_rz0
    a_bias = b_ih + b_fc[0, 0] * w_ih[3:4, :] + bhh_rz0
    b_hh_n = b_hh[:, 2 * H:]
    return (w_ih, w_hh, w_big, a1_bias, a_bias, b_hh_n, w_fc, b_fc)


def decoder_forward(one_batch, encoder_outputs, hidden, folded):
    """Mirrors Decoder.forward under the default config.

    one_batch[0] (batch_ids) and encoder_outputs are unused because
    embedding_layer is None and attention_ind is False.
    """
    del encoder_outputs  # attention path disabled under this config
    y = jnp.transpose(one_batch[2], (1, 0, 2)).astype(jnp.float32)  # (T, B, 4)
    _, B, _ = y.shape
    w_ih, w_hh, w_big, a1_bias, a_bias, b_hh_n, w_fc, b_fc = folded

    out_col = pl.pallas_call(
        decoder_kernel,
        out_shape=jax.ShapeDtypeStruct((NUM_STEPS * B, 1), jnp.float32),
        in_specs=[pl.BlockSpec(memory_space=pltpu.MemorySpace.VMEM)] * 10,
        out_specs=pl.BlockSpec(memory_space=pltpu.MemorySpace.VMEM),
    )(y, hidden.astype(jnp.float32), w_ih, w_hh, w_big,
      a1_bias, a_bias, b_hh_n, w_fc, b_fc)

    # Row t*B + b is already time-major: a free row-major reshape gives the
    # torch result layout torch.cat(output_list, 1).transpose(0, 1) == (12, B).
    # (No XLA transpose in the graph -- review opt #5.)
    return out_col.reshape(NUM_STEPS, B)


def decoder_reference(y_tm, hidden, params):
    """Pure-JAX reference, written exactly like the (unfused) torch loop."""
    w_ih, w_hh, b_ih, b_hh, w_fc, b_fc = params
    H = DEC_DIM
    x = y_tm[0]
    x = jnp.where(jnp.isnan(x), 0.0, x)
    h = hidden
    outs = []
    for i in range(1, NUM_STEPS + 1):
        gi = jnp.dot(x, w_ih, preferred_element_type=jnp.float32) + b_ih
        gh = jnp.dot(h, w_hh, preferred_element_type=jnp.float32) + b_hh
        r = jax.nn.sigmoid(gi[:, :H] + gh[:, :H])
        z = jax.nn.sigmoid(gi[:, H:2 * H] + gh[:, H:2 * H])
        n = jnp.tanh(gi[:, 2 * H:] + r * gh[:, 2 * H:])
        h = (1.0 - z) * n + z * h
        out = jnp.dot(h, w_fc, preferred_element_type=jnp.float32) + b_fc
        outs.append(out)
        x = jnp.concatenate([y_tm[i][:, 1:], out], axis=1)
    return jnp.concatenate(outs, axis=1).T   # (12, B)


if __name__ == "__main__":
    key = jax.random.PRNGKey(0)
    k_param, k_y, k_h, k_enc = jax.random.split(key, 4)

    B = 8          # batch
    T = 13         # need y_[0] .. y_[11] (torch also indexes y_[12], unused)
    ENC_LEN = 48
    ENC_DIM = 64   # encoder feature dim (unused: attention disabled)

    params = init_params(k_param)
    folded = fold_params(params)

    # one_batch = (batch_ids, <unused>, y) ; y is (B, T, dec_input_dim) pre-permute
    batch_ids = jnp.arange(B, dtype=jnp.int32)
    y = jax.random.normal(k_y, (B, T, DEC_INPUT_DIM), jnp.float32)
    # exercise the NaN-zeroing path on the first decoder input
    y = y.at[0, 0, 0].set(jnp.nan)
    one_batch = (batch_ids, None, y)

    hidden = jax.random.normal(k_h, (B, DEC_DIM), jnp.float32)
    encoder_outputs = jax.random.normal(k_enc, (ENC_LEN, B, 2 * ENC_DIM), jnp.float32)

    y_pred = decoder_forward(one_batch, encoder_outputs, hidden, folded)
    jax.block_until_ready(y_pred)
    assert y_pred.shape == (NUM_STEPS, B)
    assert bool(jnp.all(jnp.isfinite(y_pred)))

    # Re-validate the algebraic folds against the unfused reference (loose
    # tolerance: MXU default-precision matmuls + fp reassociation of the fold).
    y_ref = decoder_reference(jnp.transpose(y, (1, 0, 2)), hidden, params)
    max_err = float(jnp.max(jnp.abs(y_pred - y_ref)))
    assert max_err < 5e-2, f"mismatch vs reference: {max_err}"

    print("KERNEL_OK")
</pallas_src>

<mosaic_0001>
module attributes {stable_mosaic.version = 11 : i64} {
  func.func @decoder_kernel(%arg0: memref<13x8x4xf32, #tpu.memory_space<vmem>>, %arg1: memref<8x32xf32, #tpu.memory_space<vmem>>, %arg2: memref<4x96xf32, #tpu.memory_space<vmem>>, %arg3: memref<32x96xf32, #tpu.memory_space<vmem>>, %arg4: memref<32x128xf32, #tpu.memory_space<vmem>>, %arg5: memref<1x96xf32, #tpu.memory_space<vmem>>, %arg6: memref<1x96xf32, #tpu.memory_space<vmem>>, %arg7: memref<1x32xf32, #tpu.memory_space<vmem>>, %arg8: memref<32x1xf32, #tpu.memory_space<vmem>>, %arg9: memref<1x1xf32, #tpu.memory_space<vmem>>, %arg10: memref<96x1xf32, #tpu.memory_space<vmem>>) attributes {dimension_semantics = [], scalar_prefetch = 0 : i64, scratch_operands = 0 : i64, tpu.core_type = #tpu.core_type<tc>} {
    %c0 = arith.constant 0 : index
    %c0_0 = arith.constant 0 : index
    %0 = vector.load %arg7[%c0, %c0_0] : memref<1x32xf32, #tpu.memory_space<vmem>>, vector<1x32xf32>
    %c0_1 = arith.constant 0 : index
    %c0_2 = arith.constant 0 : index
    %1 = vector.load %arg2[%c0_1, %c0_2] : memref<4x96xf32, #tpu.memory_space<vmem>>, vector<4x96xf32>
    %c0_3 = arith.constant 0 : index
    %c0_4 = arith.constant 0 : index
    %c0_5 = arith.constant 0 : index
    %2 = vector.load %arg0[%c0_3, %c0_4, %c0_5] : memref<13x8x4xf32, #tpu.memory_space<vmem>>, vector<1x8x4xf32>
    %3 = vector.shape_cast %2 : vector<1x8x4xf32> to vector<8x4xf32>
    %4 = arith.cmpf one, %3, %3 : vector<8x4xf32>
    %cst = arith.constant 0.000000e+00 : f32
    %5 = vector.broadcast %cst : f32 to vector<8x4xf32>
    %6 = arith.select %4, %5, %3 : vector<8x4xi1>, vector<8x4xf32>
    %cst_6 = arith.constant dense<0.000000e+00> : vector<8x96xf32>
    %7 = tpu.matmul %6, %1, %cst_6 {dimension_numbers = #tpu.dot_dimension_numbers<[1], [0], [0], [1], [0, 0, 1, 1], [], []>} : vector<8x4xf32>, vector<4x96xf32>, vector<8x96xf32> -> vector<8x96xf32>
    %c0_7 = arith.constant 0 : index
    %c0_8 = arith.constant 0 : index
    %8 = vector.load %arg5[%c0_7, %c0_8] : memref<1x96xf32, #tpu.memory_space<vmem>>, vector<1x96xf32>
    %9 = vector.broadcast %8 : vector<1x96xf32> to vector<8x96xf32>
    %10 = arith.addf %7, %9 : vector<8x96xf32>
    %c1 = arith.constant 1 : index
    %c0_9 = arith.constant 0 : index
    %c0_10 = arith.constant 0 : index
    %11 = vector.load %arg0[%c1, %c0_9, %c0_10] : memref<13x8x4xf32, #tpu.memory_space<vmem>>, vector<1x8x4xf32>
    %12 = vector.shape_cast %11 : vector<1x8x4xf32> to vector<8x4xf32>
    %13 = vector.extract_strided_slice %12 {offsets = [0, 1], sizes = [8, 3], strides = [1, 1]} : vector<8x4xf32> to vector<8x3xf32>
    %c2 = arith.constant 2 : index
    %c0_11 = arith.constant 0 : index
    %c0_12 = arith.constant 0 : index
    %14 = vector.load %arg0[%c2, %c0_11, %c0_12] : memref<13x8x4xf32, #tpu.memory_space<vmem>>, vector<1x8x4xf32>
    %15 = vector.shape_cast %14 : vector<1x8x4xf32> to vector<8x4xf32>
    %16 = vector.extract_strided_slice %15 {offsets = [0, 1], sizes = [8, 3], strides = [1, 1]} : vector<8x4xf32> to vector<8x3xf32>
    %c3 = arith.constant 3 : index
    %c0_13 = arith.constant 0 : index
    %c0_14 = arith.constant 0 : index
    %17 = vector.load %arg0[%c3, %c0_13, %c0_14] : memref<13x8x4xf32, #tpu.memory_space<vmem>>, vector<1x8x4xf32>
    %18 = vector.shape_cast %17 : vector<1x8x4xf32> to vector<8x4xf32>
    %19 = vector.extract_strided_slice %18 {offsets = [0, 1], sizes = [8, 3], strides = [1, 1]} : vector<8x4xf32> to vector<8x3xf32>
    %c4 = arith.constant 4 : index
    %c0_15 = arith.constant 0 : index
    %c0_16 = arith.constant 0 : index
    %20 = vector.load %arg0[%c4, %c0_15, %c0_16] : memref<13x8x4xf32, #tpu.memory_space<vmem>>, vector<1x8x4xf32>
    %21 = vector.shape_cast %20 : vector<1x8x4xf32> to vector<8x4xf32>
    %22 = vector.extract_strided_slice %21 {offsets = [0, 1], sizes = [8, 3], strides = [1, 1]} : vector<8x4xf32> to vector<8x3xf32>
    %c5 = arith.constant 5 : index
    %c0_17 = arith.constant 0 : index
    %c0_18 = arith.constant 0 : index
    %23 = vector.load %arg0[%c5, %c0_17, %c0_18] : memref<13x8x4xf32, #tpu.memory_space<vmem>>, vector<1x8x4xf32>
    %24 = vector.shape_cast %23 : vector<1x8x4xf32> to vector<8x4xf32>
    %25 = vector.extract_strided_slice %24 {offsets = [0, 1], sizes = [8, 3], strides = [1, 1]} : vector<8x4xf32> to vector<8x3xf32>
    %c6 = arith.constant 6 : index
    %c0_19 = arith.constant 0 : index
    %c0_20 = arith.constant 0 : index
    %26 = vector.load %arg0[%c6, %c0_19, %c0_20] : memref<13x8x4xf32, #tpu.memory_space<vmem>>, vector<1x8x4xf32>
    %27 = vector.shape_cast %26 : vector<1x8x4xf32> to vector<8x4xf32>
    %28 = vector.extract_strided_slice %27 {offsets = [0, 1], sizes = [8, 3], strides = [1, 1]} : vector<8x4xf32> to vector<8x3xf32>
    %c7 = arith.constant 7 : index
    %c0_21 = arith.constant 0 : index
    %c0_22 = arith.constant 0 : index
    %29 = vector.load %arg0[%c7, %c0_21, %c0_22] : memref<13x8x4xf32, #tpu.memory_space<vmem>>, vector<1x8x4xf32>
    %30 = vector.shape_cast %29 : vector<1x8x4xf32> to vector<8x4xf32>
    %31 = vector.extract_strided_slice %30 {offsets = [0, 1], sizes = [8, 3], strides = [1, 1]} : vector<8x4xf32> to vector<8x3xf32>
    %c8 = arith.constant 8 : index
    %c0_23 = arith.constant 0 : index
    %c0_24 = arith.constant 0 : index
    %32 = vector.load %arg0[%c8, %c0_23, %c0_24] : memref<13x8x4xf32, #tpu.memory_space<vmem>>, vector<1x8x4xf32>
    %33 = vector.shape_cast %32 : vector<1x8x4xf32> to vector<8x4xf32>
    %34 = vector.extract_strided_slice %33 {offsets = [0, 1], sizes = [8, 3], strides = [1, 1]} : vector<8x4xf32> to vector<8x3xf32>
    %c9 = arith.constant 9 : index
    %c0_25 = arith.constant 0 : index
    %c0_26 = arith.constant 0 : index
    %35 = vector.load %arg0[%c9, %c0_25, %c0_26] : memref<13x8x4xf32, #tpu.memory_space<vmem>>, vector<1x8x4xf32>
    %36 = vector.shape_cast %35 : vector<1x8x4xf32> to vector<8x4xf32>
    %37 = vector.extract_strided_slice %36 {offsets = [0, 1], sizes = [8, 3], strides = [1, 1]} : vector<8x4xf32> to vector<8x3xf32>
    %c10 = arith.constant 10 : index
    %c0_27 = arith.constant 0 : index
    %c0_28 = arith.constant 0 : index
    %38 = vector.load %arg0[%c10, %c0_27, %c0_28] : memref<13x8x4xf32, #tpu.memory_space<vmem>>, vector<1x8x4xf32>
    %39 = vector.shape_cast %38 : vector<1x8x4xf32> to vector<8x4xf32>
    %40 = vector.extract_strided_slice %39 {offsets = [0, 1], sizes = [8, 3], strides = [1, 1]} : vector<8x4xf32> to vector<8x3xf32>
    %c11 = arith.constant 11 : index
    %c0_29 = arith.constant 0 : index
    %c0_30 = arith.constant 0 : index
    %41 = vector.load %arg0[%c11, %c0_29, %c0_30] : memref<13x8x4xf32, #tpu.memory_space<vmem>>, vector<1x8x4xf32>
    %42 = vector.shape_cast %41 : vector<1x8x4xf32> to vector<8x4xf32>
    %43 = vector.extract_strided_slice %42 {offsets = [0, 1], sizes = [8, 3], strides = [1, 1]} : vector<8x4xf32> to vector<8x3xf32>
    %44 = tpu.concatenate %13, %16, %19, %22, %25, %28, %31, %34, %37, %40, %43 in 0 : vector<8x3xf32>, vector<8x3xf32>, vector<8x3xf32>, vector<8x3xf32>, vector<8x3xf32>, vector<8x3xf32>, vector<8x3xf32>, vector<8x3xf32>, vector<8x3xf32>, vector<8x3xf32>, vector<8x3xf32> -> vector<88x3xf32>
    %45 = vector.extract_strided_slice %1 {offsets = [0, 0], sizes = [3, 96], strides = [1, 1]} : vector<4x96xf32> to vector<3x96xf32>
    %cst_31 = arith.constant dense<0.000000e+00> : vector<88x96xf32>
    %46 = tpu.matmul %44, %45, %cst_31 {dimension_numbers = #tpu.dot_dimension_numbers<[1], [0], [0], [1], [0, 0, 1, 1], [], []>} : vector<88x3xf32>, vector<3x96xf32>, vector<88x96xf32> -> vector<88x96xf32>
    %c0_32 = arith.constant 0 : index
    %c0_33 = arith.constant 0 : index
    %47 = vector.load %arg6[%c0_32, %c0_33] : memref<1x96xf32, #tpu.memory_space<vmem>>, vector<1x96xf32>
    %48 = vector.broadcast %47 : vector<1x96xf32> to vector<88x96xf32>
    %49 = arith.addf %46, %48 : vector<88x96xf32>
    %c0_34 = arith.constant 0 : index
    %c0_35 = arith.constant 0 : index
    %50 = vector.load %arg1[%c0_34, %c0_35] : memref<8x32xf32, #tpu.memory_space<vmem>>, vector<8x32xf32>
    %c0_36 = arith.constant 0 : index
    %c0_37 = arith.constant 0 : index
    %51 = vector.load %arg3[%c0_36, %c0_37] : memref<32x96xf32, #tpu.memory_space<vmem>>, vector<32x96xf32>
    %cst_38 = arith.constant dense<0.000000e+00> : vector<8x96xf32>
    %52 = tpu.matmul %50, %51, %cst_38 {dimension_numbers = #tpu.dot_dimension_numbers<[1], [0], [0], [1], [0, 0, 1, 1], [], []>} : vector<8x32xf32>, vector<32x96xf32>, vector<8x96xf32> -> vector<8x96xf32>
    %53 = vector.extract_strided_slice %10 {offsets = [0, 0], sizes = [8, 32], strides = [1, 1]} : vector<8x96xf32> to vector<8x32xf32>
    %54 = vector.extract_strided_slice %52 {offsets = [0, 0], sizes = [8, 32], strides = [1, 1]} : vector<8x96xf32> to vector<8x32xf32>
    %55 = arith.addf %53, %54 : vector<8x32xf32>
    %56 = arith.negf %55 : vector<8x32xf32>
    %57 = math.exp %56 : vector<8x32xf32>
    %cst_39 = arith.constant 1.000000e+00 : f32
    %58 = vector.broadcast %cst_39 : f32 to vector<8x32xf32>
    %59 = arith.addf %58, %57 : vector<8x32xf32>
    %60 = arith.divf %58, %59 : vector<8x32xf32>
    %61 = vector.extract_strided_slice %10 {offsets = [0, 32], sizes = [8, 32], strides = [1, 1]} : vector<8x96xf32> to vector<8x32xf32>
    %62 = vector.extract_strided_slice %52 {offsets = [0, 32], sizes = [8, 32], strides = [1, 1]} : vector<8x96xf32> to vector<8x32xf32>
    %63 = arith.addf %61, %62 : vector<8x32xf32>
    %64 = arith.negf %63 : vector<8x32xf32>
    %65 = math.exp %64 : vector<8x32xf32>
    %cst_40 = arith.constant 1.000000e+00 : f32
    %66 = vector.broadcast %cst_40 : f32 to vector<8x32xf32>
    %67 = arith.addf %66, %65 : vector<8x32xf32>
    %68 = arith.divf %66, %67 : vector<8x32xf32>
    %69 = vector.extract_strided_slice %10 {offsets = [0, 64], sizes = [8, 32], strides = [1, 1]} : vector<8x96xf32> to vector<8x32xf32>
    %cst_41 = arith.constant 0.000000e+00 : f32
    %70 = vector.broadcast %cst_41 : f32 to vector<8x32xf32>
    %71 = arith.addf %69, %70 : vector<8x32xf32>
    %72 = vector.extract_strided_slice %52 {offsets = [0, 64], sizes = [8, 32], strides = [1, 1]} : vector<8x96xf32> to vector<8x32xf32>
    %73 = vector.broadcast %0 : vector<1x32xf32> to vector<8x32xf32>
    %74 = arith.addf %72, %73 : vector<8x32xf32>
    %75 = arith.mulf %60, %74 : vector<8x32xf32>
    %76 = arith.addf %71, %75 : vector<8x32xf32>
    %77 = math.tanh %76 : vector<8x32xf32>
    %cst_42 = arith.constant 1.000000e+00 : f32
    %78 = vector.broadcast %cst_42 : f32 to vector<8x32xf32>
    %79 = arith.subf %78, %68 : vector<8x32xf32>
    %80 = arith.mulf %79, %77 : vector<8x32xf32>
    %81 = arith.mulf %68, %50 : vector<8x32xf32>
    %82 = arith.addf %80, %81 : vector<8x32xf32>
    %c0_43 = arith.constant 0 : index
    %c0_44 = arith.constant 0 : index
    %83 = vector.load %arg4[%c0_43, %c0_44] : memref<32x128xf32, #tpu.memory_space<vmem>>, vector<32x128xf32>
    %cst_45 = arith.constant dense<0.000000e+00> : vector<8x128xf32>
    %84 = tpu.matmul %82, %83, %cst_45 {dimension_numbers = #tpu.dot_dimension_numbers<[1], [0], [0], [1], [0, 0, 1, 1], [], []>} : vector<8x32xf32>, vector<32x128xf32>, vector<8x128xf32> -> vector<8x128xf32>
    %85 = vector.extract_strided_slice %49 {offsets = [0, 0], sizes = [8, 96], strides = [1, 1]} : vector<88x96xf32> to vector<8x96xf32>
    %86 = vector.extract_strided_slice %84 {offsets = [0, 0], sizes = [8, 96], strides = [1, 1]} : vector<8x128xf32> to vector<8x96xf32>
    %87 = vector.extract_strided_slice %84 {offsets = [0, 96], sizes = [8, 32], strides = [1, 1]} : vector<8x128xf32> to vector<8x32xf32>
    %88 = vector.extract_strided_slice %85 {offsets = [0, 0], sizes = [8, 32], strides = [1, 1]} : vector<8x96xf32> to vector<8x32xf32>
    %89 = vector.extract_strided_slice %86 {offsets = [0, 0], sizes = [8, 32], strides = [1, 1]} : vector<8x96xf32> to vector<8x32xf32>
    %90 = arith.addf %88, %89 : vector<8x32xf32>
    %91 = arith.negf %90 : vector<8x32xf32>
    %92 = math.exp %91 : vector<8x32xf32>
    %cst_46 = arith.constant 1.000000e+00 : f32
    %93 = vector.broadcast %cst_46 : f32 to vector<8x32xf32>
    %94 = arith.addf %93, %92 : vector<8x32xf32>
    %95 = arith.divf %93, %94 : vector<8x32xf32>
    %96 = vector.extract_strided_slice %85 {offsets = [0, 32], sizes = [8, 32], strides = [1, 1]} : vector<8x96xf32> to vector<8x32xf32>
    %97 = vector.extract_strided_slice %86 {offsets = [0, 32], sizes = [8, 32], strides = [1, 1]} : vector<8x96xf32> to vector<8x32xf32>
    %98 = arith.addf %96, %97 : vector<8x32xf32>
    %99 = arith.negf %98 : vector<8x32xf32>
    %100 = math.exp %99 : vector<8x32xf32>
    %cst_47 = arith.constant 1.000000e+00 : f32
    %101 = vector.broadcast %cst_47 : f32 to vector<8x32xf32>
    %102 = arith.addf %101, %100 : vector<8x32xf32>
    %103 = arith.divf %101, %102 : vector<8x32xf32>
    %104 = vector.extract_strided_slice %85 {offsets = [0, 64], sizes = [8, 32], strides = [1, 1]} : vector<8x96xf32> to vector<8x32xf32>
    %105 = arith.addf %104, %87 : vector<8x32xf32>
    %106 = vector.extract_strided_slice %86 {offsets = [0, 64], sizes = [8, 32], strides = [1, 1]} : vector<8x96xf32> to vector<8x32xf32>
    %107 = vector.broadcast %0 : vector<1x32xf32> to vector<8x32xf32>
    %108 = arith.addf %106, %107 : vector<8x32xf32>
    %109 = arith.mulf %95, %108 : vector<8x32xf32>
    %110 = arith.addf %105, %109 : vector<8x32xf32>
    %111 = math.tanh %110 : vector<8x32xf32>
    %cst_48 = arith.constant 1.000000e+00 : f32
    %112 = vector.broadcast %cst_48 : f32 to vector<8x32xf32>
    %113 = arith.subf %112, %103 : vector<8x32xf32>
    %114 = arith.mulf %113, %111 : vector<8x32xf32>
    %115 = arith.mulf %103, %82 : vector<8x32xf32>
    %116 = arith.addf %114, %115 : vector<8x32xf32>
    %cst_49 = arith.constant dense<0.000000e+00> : vector<8x128xf32>
    %117 = tpu.matmul %116, %83, %cst_49 {dimension_numbers = #tpu.dot_dimension_numbers<[1], [0], [0], [1], [0, 0, 1, 1], [], []>} : vector<8x32xf32>, vector<32x128xf32>, vector<8x128xf32> -> vector<8x128xf32>
    %118 = vector.extract_strided_slice %49 {offsets = [8, 0], sizes = [8, 96], strides = [1, 1]} : vector<88x96xf32> to vector<8x96xf32>
    %119 = vector.extract_strided_slice %117 {offsets = [0, 0], sizes = [8, 96], strides = [1, 1]} : vector<8x128xf32> to vector<8x96xf32>
    %120 = vector.extract_strided_slice %117 {offsets = [0, 96], sizes = [8, 32], strides = [1, 1]} : vector<8x128xf32> to vector<8x32xf32>
    %121 = vector.extract_strided_slice %118 {offsets = [0, 0], sizes = [8, 32], strides = [1, 1]} : vector<8x96xf32> to vector<8x32xf32>
    %122 = vector.extract_strided_slice %119 {offsets = [0, 0], sizes = [8, 32], strides = [1, 1]} : vector<8x96xf32> to vector<8x32xf32>
    %123 = arith.addf %121, %122 : vector<8x32xf32>
    %124 = arith.negf %123 : vector<8x32xf32>
    %125 = math.exp %124 : vector<8x32xf32>
    %cst_50 = arith.constant 1.000000e+00 : f32
    %126 = vector.broadcast %cst_50 : f32 to vector<8x32xf32>
    %127 = arith.addf %126, %125 : vector<8x32xf32>
    %128 = arith.divf %126, %127 : vector<8x32xf32>
    %129 = vector.extract_strided_slice %118 {offsets = [0, 32], sizes = [8, 32], strides = [1, 1]} : vector<8x96xf32> to vector<8x32xf32>
    %130 = vector.extract_strided_slice %119 {offsets = [0, 32], sizes = [8, 32], strides = [1, 1]} : vector<8x96xf32> to vector<8x32xf32>
    %131 = arith.addf %129, %130 : vector<8x32xf32>
    %132 = arith.negf %131 : vector<8x32xf32>
    %133 = math.exp %132 : vector<8x32xf32>
    %cst_51 = arith.constant 1.000000e+00 : f32
    %134 = vector.broadcast %cst_51 : f32 to vector<8x32xf32>
    %135 = arith.addf %134, %133 : vector<8x32xf32>
    %136 = arith.divf %134, %135 : vector<8x32xf32>
    %137 = vector.extract_strided_slice %118 {offsets = [0, 64], sizes = [8, 32], strides = [1, 1]} : vector<8x96xf32> to vector<8x32xf32>
    %138 = arith.addf %137, %120 : vector<8x32xf32>
    %139 = vector.extract_strided_slice %119 {offsets = [0, 64], sizes = [8, 32], strides = [1, 1]} : vector<8x96xf32> to vector<8x32xf32>
    %140 = vector.broadcast %0 : vector<1x32xf32> to vector<8x32xf32>
    %141 = arith.addf %139, %140 : vector<8x32xf32>
    %142 = arith.mulf %128, %141 : vector<8x32xf32>
    %143 = arith.addf %138, %142 : vector<8x32xf32>
    %144 = math.tanh %143 : vector<8x32xf32>
    %cst_52 = arith.constant 1.000000e+00 : f32
    %145 = vector.broadcast %cst_52 : f32 to vector<8x32xf32>
    %146 = arith.subf %145, %136 : vector<8x32xf32>
    %147 = arith.mulf %146, %144 : vector<8x32xf32>
    %148 = arith.mulf %136, %116 : vector<8x32xf32>
    %149 = arith.addf %147, %148 : vector<8x32xf32>
    %cst_53 = arith.constant dense<0.000000e+00> : vector<8x128xf32>
    %150 = tpu.matmul %149, %83, %cst_53 {dimension_numbers = #tpu.dot_dimension_numbers<[1], [0], [0], [1], [0, 0, 1, 1], [], []>} : vector<8x32xf32>, vector<32x128xf32>, vector<8x128xf32> -> vector<8x128xf32>
    %151 = vector.extract_strided_slice %49 {offsets = [16, 0], sizes = [8, 96], strides = [1, 1]} : vector<88x96xf32> to vector<8x96xf32>
    %152 = vector.extract_strided_slice %150 {offsets = [0, 0], sizes = [8, 96], strides = [1, 1]} : vector<8x128xf32> to vector<8x96xf32>
    %153 = vector.extract_strided_slice %150 {offsets = [0, 96], sizes = [8, 32], strides = [1, 1]} : vector<8x128xf32> to vector<8x32xf32>
    %154 = vector.extract_strided_slice %151 {offsets = [0, 0], sizes = [8, 32], strides = [1, 1]} : vector<8x96xf32> to vector<8x32xf32>
    %155 = vector.extract_strided_slice %152 {offsets = [0, 0], sizes = [8, 32], strides = [1, 1]} : vector<8x96xf32> to vector<8x32xf32>
    %156 = arith.addf %154, %155 : vector<8x32xf32>
    %157 = arith.negf %156 : vector<8x32xf32>
    %158 = math.exp %157 : vector<8x32xf32>
    %cst_54 = arith.constant 1.000000e+00 : f32
    %159 = vector.broadcast %cst_54 : f32 to vector<8x32xf32>
    %160 = arith.addf %159, %158 : vector<8x32xf32>
    %161 = arith.divf %159, %160 : vector<8x32xf32>
    %162 = vector.extract_strided_slice %151 {offsets = [0, 32], sizes = [8, 32], strides = [1, 1]} : vector<8x96xf32> to vector<8x32xf32>
    %163 = vector.extract_strided_slice %152 {offsets = [0, 32], sizes = [8, 32], strides = [1, 1]} : vector<8x96xf32> to vector<8x32xf32>
    %164 = arith.addf %162, %163 : vector<8x32xf32>
    %165 = arith.negf %164 : vector<8x32xf32>
    %166 = math.exp %165 : vector<8x32xf32>
    %cst_55 = arith.constant 1.000000e+00 : f32
    %167 = vector.broadcast %cst_55 : f32 to vector<8x32xf32>
    %168 = arith.addf %167, %166 : vector<8x32xf32>
    %169 = arith.divf %167, %168 : vector<8x32xf32>
    %170 = vector.extract_strided_slice %151 {offsets = [0, 64], sizes = [8, 32], strides = [1, 1]} : vector<8x96xf32> to vector<8x32xf32>
    %171 = arith.addf %170, %153 : vector<8x32xf32>
    %172 = vector.extract_strided_slice %152 {offsets = [0, 64], sizes = [8, 32], strides = [1, 1]} : vector<8x96xf32> to vector<8x32xf32>
    %173 = vector.broadcast %0 : vector<1x32xf32> to vector<8x32xf32>
    %174 = arith.addf %172, %173 : vector<8x32xf32>
    %175 = arith.mulf %161, %174 : vector<8x32xf32>
    %176 = arith.addf %171, %175 : vector<8x32xf32>
    %177 = math.tanh %176 : vector<8x32xf32>
    %cst_56 = arith.constant 1.000000e+00 : f32
    %178 = vector.broadcast %cst_56 : f32 to vector<8x32xf32>
    %179 = arith.subf %178, %169 : vector<8x32xf32>
    %180 = arith.mulf %179, %177 : vector<8x32xf32>
    %181 = arith.mulf %169, %149 : vector<8x32xf32>
    %182 = arith.addf %180, %181 : vector<8x32xf32>
    %cst_57 = arith.constant dense<0.000000e+00> : vector<8x128xf32>
    %183 = tpu.matmul %182, %83, %cst_57 {dimension_numbers = #tpu.dot_dimension_numbers<[1], [0], [0], [1], [0, 0, 1, 1], [], []>} : vector<8x32xf32>, vector<32x128xf32>, vector<8x128xf32> -> vector<8x128xf32>
    %184 = vector.extract_strided_slice %49 {offsets = [24, 0], sizes = [8, 96], strides = [1, 1]} : vector<88x96xf32> to vector<8x96xf32>
    %185 = vector.extract_strided_slice %183 {offsets = [0, 0], sizes = [8, 96], strides = [1, 1]} : vector<8x128xf32> to vector<8x96xf32>
    %186 = vector.extract_strided_slice %183 {offsets = [0, 96], sizes = [8, 32], strides = [1, 1]} : vector<8x128xf32> to vector<8x32xf32>
    %187 = vector.extract_strided_slice %184 {offsets = [0, 0], sizes = [8, 32], strides = [1, 1]} : vector<8x96xf32> to vector<8x32xf32>
    %188 = vector.extract_strided_slice %185 {offsets = [0, 0], sizes = [8, 32], strides = [1, 1]} : vector<8x96xf32> to vector<8x32xf32>
    %189 = arith.addf %187, %188 : vector<8x32xf32>
    %190 = arith.negf %189 : vector<8x32xf32>
    %191 = math.exp %190 : vector<8x32xf32>
    %cst_58 = arith.constant 1.000000e+00 : f32
    %192 = vector.broadcast %cst_58 : f32 to vector<8x32xf32>
    %193 = arith.addf %192, %191 : vector<8x32xf32>
    %194 = arith.divf %192, %193 : vector<8x32xf32>
    %195 = vector.extract_strided_slice %184 {offsets = [0, 32], sizes = [8, 32], strides = [1, 1]} : vector<8x96xf32> to vector<8x32xf32>
    %196 = vector.extract_strided_slice %185 {offsets = [0, 32], sizes = [8, 32], strides = [1, 1]} : vector<8x96xf32> to vector<8x32xf32>
    %197 = arith.addf %195, %196 : vector<8x32xf32>
    %198 = arith.negf %197 : vector<8x32xf32>
    %199 = math.exp %198 : vector<8x32xf32>
    %cst_59 = arith.constant 1.000000e+00 : f32
    %200 = vector.broadcast %cst_59 : f32 to vector<8x32xf32>
    %201 = arith.addf %200, %199 : vector<8x32xf32>
    %202 = arith.divf %200, %201 : vector<8x32xf32>
    %203 = vector.extract_strided_slice %184 {offsets = [0, 64], sizes = [8, 32], strides = [1, 1]} : vector<8x96xf32> to vector<8x32xf32>
    %204 = arith.addf %203, %186 : vector<8x32xf32>
    %205 = vector.extract_strided_slice %185 {offsets = [0, 64], sizes = [8, 32], strides = [1, 1]} : vector<8x96xf32> to vector<8x32xf32>
    %206 = vector.broadcast %0 : vector<1x32xf32> to vector<8x32xf32>
    %207 = arith.addf %205, %206 : vector<8x32xf32>
    %208 = arith.mulf %194, %207 : vector<8x32xf32>
    %209 = arith.addf %204, %208 : vector<8x32xf32>
    %210 = math.tanh %209 : vector<8x32xf32>
    %cst_60 = arith.constant 1.000000e+00 : f32
    %211 = vector.broadcast %cst_60 : f32 to vector<8x32xf32>
    %212 = arith.subf %211, %202 : vector<8x32xf32>
    %213 = arith.mulf %212, %210 : vector<8x32xf32>
    %214 = arith.mulf %202, %182 : vector<8x32xf32>
    %215 = arith.addf %213, %214 : vector<8x32xf32>
    %cst_61 = arith.constant dense<0.000000e+00> : vector<8x128xf32>
    %216 = tpu.matmul %215, %83, %cst_61 {dimension_numbers = #tpu.dot_dimension_numbers<[1], [0], [0], [1], [0, 0, 1, 1], [], []>} : vector<8x32xf32>, vector<32x128xf32>, vector<8x128xf32> -> vector<8x128xf32>
    %217 = vector.extract_strided_slice %49 {offsets = [32, 0], sizes = [8, 96], strides = [1, 1]} : vector<88x96xf32> to vector<8x96xf32>
    %218 = vector.extract_strided_slice %216 {offsets = [0, 0], sizes = [8, 96], strides = [1, 1]} : vector<8x128xf32> to vector<8x96xf32>
    %219 = vector.extract_strided_slice %216 {offsets = [0, 96], sizes = [8, 32], strides = [1, 1]} : vector<8x128xf32> to vector<8x32xf32>
    %220 = vector.extract_strided_slice %217 {offsets = [0, 0], sizes = [8, 32], strides = [1, 1]} : vector<8x96xf32> to vector<8x32xf32>
    %221 = vector.extract_strided_slice %218 {offsets = [0, 0], sizes = [8, 32], strides = [1, 1]} : vector<8x96xf32> to vector<8x32xf32>
    %222 = arith.addf %220, %221 : vector<8x32xf32>
    %223 = arith.negf %222 : vector<8x32xf32>
    %224 = math.exp %223 : vector<8x32xf32>
    %cst_62 = arith.constant 1.000000e+00 : f32
    %225 = vector.broadcast %cst_62 : f32 to vector<8x32xf32>
    %226 = arith.addf %225, %224 : vector<8x32xf32>
    %227 = arith.divf %225, %226 : vector<8x32xf32>
    %228 = vector.extract_strided_slice %217 {offsets = [0, 32], sizes = [8, 32], strides = [1, 1]} : vector<8x96xf32> to vector<8x32xf32>
    %229 = vector.extract_strided_slice %218 {offsets = [0, 32], sizes = [8, 32], strides = [1, 1]} : vector<8x96xf32> to vector<8x32xf32>
    %230 = arith.addf %228, %229 : vector<8x32xf32>
    %231 = arith.negf %230 : vector<8x32xf32>
    %232 = math.exp %231 : vector<8x32xf32>
    %cst_63 = arith.constant 1.000000e+00 : f32
    %233 = vector.broadcast %cst_63 : f32 to vector<8x32xf32>
    %234 = arith.addf %233, %232 : vector<8x32xf32>
    %235 = arith.divf %233, %234 : vector<8x32xf32>
    %236 = vector.extract_strided_slice %217 {offsets = [0, 64], sizes = [8, 32], strides = [1, 1]} : vector<8x96xf32> to vector<8x32xf32>
    %237 = arith.addf %236, %219 : vector<8x32xf32>
    %238 = vector.extract_strided_slice %218 {offsets = [0, 64], sizes = [8, 32], strides = [1, 1]} : vector<8x96xf32> to vector<8x32xf32>
    %239 = vector.broadcast %0 : vector<1x32xf32> to vector<8x32xf32>
    %240 = arith.addf %238, %239 : vector<8x32xf32>
    %241 = arith.mulf %227, %240 : vector<8x32xf32>
    %242 = arith.addf %237, %241 : vector<8x32xf32>
    %243 = math.tanh %242 : vector<8x32xf32>
    %cst_64 = arith.constant 1.000000e+00 : f32
    %244 = vector.broadcast %cst_64 : f32 to vector<8x32xf32>
    %245 = arith.subf %244, %235 : vector<8x32xf32>
    %246 = arith.mulf %245, %243 : vector<8x32xf32>
    %247 = arith.mulf %235, %215 : vector<8x32xf32>
    %248 = arith.addf %246, %247 : vector<8x32xf32>
    %cst_65 = arith.constant dense<0.000000e+00> : vector<8x128xf32>
    %249 = tpu.matmul %248, %83, %cst_65 {dimension_numbers = #tpu.dot_dimension_numbers<[1], [0], [0], [1], [0, 0, 1, 1], [], []>} : vector<8x32xf32>, vector<32x128xf32>, vector<8x128xf32> -> vector<8x128xf32>
    %250 = vector.extract_strided_slice %49 {offsets = [40, 0], sizes = [8, 96], strides = [1, 1]} : vector<88x96xf32> to vector<8x96xf32>
    %251 = vector.extract_strided_slice %249 {offsets = [0, 0], sizes = [8, 96], strides = [1, 1]} : vector<8x128xf32> to vector<8x96xf32>
    %252 = vector.extract_strided_slice %249 {offsets = [0, 96], sizes = [8, 32], strides = [1, 1]} : vector<8x128xf32> to vector<8x32xf32>
    %253 = vector.extract_strided_slice %250 {offsets = [0, 0], sizes = [8, 32], strides = [1, 1]} : vector<8x96xf32> to vector<8x32xf32>
    %254 = vector.extract_strided_slice %251 {offsets = [0, 0], sizes = [8, 32], strides = [1, 1]} : vector<8x96xf32> to vector<8x32xf32>
    %255 = arith.addf %253, %254 : vector<8x32xf32>
    %256 = arith.negf %255 : vector<8x32xf32>
    %257 = math.exp %256 : vector<8x32xf32>
    %cst_66 = arith.constant 1.000000e+00 : f32
    %258 = vector.broadcast %cst_66 : f32 to vector<8x32xf32>
    %259 = arith.addf %258, %257 : vector<8x32xf32>
    %260 = arith.divf %258, %259 : vector<8x32xf32>
    %261 = vector.extract_strided_slice %250 {offsets = [0, 32], sizes = [8, 32], strides = [1, 1]} : vector<8x96xf32> to vector<8x32xf32>
    %262 = vector.extract_strided_slice %251 {offsets = [0, 32], sizes = [8, 32], strides = [1, 1]} : vector<8x96xf32> to vector<8x32xf32>
    %263 = arith.addf %261, %262 : vector<8x32xf32>
    %264 = arith.negf %263 : vector<8x32xf32>
    %265 = math.exp %264 : vector<8x32xf32>
    %cst_67 = arith.constant 1.000000e+00 : f32
    %266 = vector.broadcast %cst_67 : f32 to vector<8x32xf32>
    %267 = arith.addf %266, %265 : vector<8x32xf32>
    %268 = arith.divf %266, %267 : vector<8x32xf32>
    %269 = vector.extract_strided_slice %250 {offsets = [0, 64], sizes = [8, 32], strides = [1, 1]} : vector<8x96xf32> to vector<8x32xf32>
    %270 = arith.addf %269, %252 : vector<8x32xf32>
    %271 = vector.extract_strided_slice %251 {offsets = [0, 64], sizes = [8, 32], strides = [1, 1]} : vector<8x96xf32> to vector<8x32xf32>
    %272 = vector.broadcast %0 : vector<1x32xf32> to vector<8x32xf32>
    %273 = arith.addf %271, %272 : vector<8x32xf32>
    %274 = arith.mulf %260, %273 : vector<8x32xf32>
    %275 = arith.addf %270, %274 : vector<8x32xf32>
    %276 = math.tanh %275 : vector<8x32xf32>
    %cst_68 = arith.constant 1.000000e+00 : f32
    %277 = vector.broadcast %cst_68 : f32 to vector<8x32xf32>
    %278 = arith.subf %277, %268 : vector<8x32xf32>
    %279 = arith.mulf %278, %276 : vector<8x32xf32>
    %280 = arith.mulf %268, %248 : vector<8x32xf32>
    %281 = arith.addf %279, %280 : vector<8x32xf32>
    %cst_69 = arith.constant dense<0.000000e+00> : vector<8x128xf32>
    %282 = tpu.matmul %281, %83, %cst_69 {dimension_numbers = #tpu.dot_dimension_numbers<[1], [0], [0], [1], [0, 0, 1, 1], [], []>} : vector<8x32xf32>, vector<32x128xf32>, vector<8x128xf32> -> vector<8x128xf32>
    %283 = vector.extract_strided_slice %49 {offsets = [48, 0], sizes = [8, 96], strides = [1, 1]} : vector<88x96xf32> to vector<8x96xf32>
    %284 = vector.extract_strided_slice %282 {offsets = [0, 0], sizes = [8, 96], strides = [1, 1]} : vector<8x128xf32> to vector<8x96xf32>
    %285 = vector.extract_strided_slice %282 {offsets = [0, 96], sizes = [8, 32], strides = [1, 1]} : vector<8x128xf32> to vector<8x32xf32>
    %286 = vector.extract_strided_slice %283 {offsets = [0, 0], sizes = [8, 32], strides = [1, 1]} : vector<8x96xf32> to vector<8x32xf32>
    %287 = vector.extract_strided_slice %284 {offsets = [0, 0], sizes = [8, 32], strides = [1, 1]} : vector<8x96xf32> to vector<8x32xf32>
    %288 = arith.addf %286, %287 : vector<8x32xf32>
    %289 = arith.negf %288 : vector<8x32xf32>
    %290 = math.exp %289 : vector<8x32xf32>
    %cst_70 = arith.constant 1.000000e+00 : f32
    %291 = vector.broadcast %cst_70 : f32 to vector<8x32xf32>
    %292 = arith.addf %291, %290 : vector<8x32xf32>
    %293 = arith.divf %291, %292 : vector<8x32xf32>
    %294 = vector.extract_strided_slice %283 {offsets = [0, 32], sizes = [8, 32], strides = [1, 1]} : vector<8x96xf32> to vector<8x32xf32>
    %295 = vector.extract_strided_slice %284 {offsets = [0, 32], sizes = [8, 32], strides = [1, 1]} : vector<8x96xf32> to vector<8x32xf32>
    %296 = arith.addf %294, %295 : vector<8x32xf32>
    %297 = arith.negf %296 : vector<8x32xf32>
    %298 = math.exp %297 : vector<8x32xf32>
    %cst_71 = arith.constant 1.000000e+00 : f32
    %299 = vector.broadcast %cst_71 : f32 to vector<8x32xf32>
    %300 = arith.addf %299, %298 : vector<8x32xf32>
    %301 = arith.divf %299, %300 : vector<8x32xf32>
    %302 = vector.extract_strided_slice %283 {offsets = [0, 64], sizes = [8, 32], strides = [1, 1]} : vector<8x96xf32> to vector<8x32xf32>
    %303 = arith.addf %302, %285 : vector<8x32xf32>
    %304 = vector.extract_strided_slice %284 {offsets = [0, 64], sizes = [8, 32], strides = [1, 1]} : vector<8x96xf32> to vector<8x32xf32>
    %305 = vector.broadcast %0 : vector<1x32xf32> to vector<8x32xf32>
    %306 = arith.addf %304, %305 : vector<8x32xf32>
    %307 = arith.mulf %293, %306 : vector<8x32xf32>
    %308 = arith.addf %303, %307 : vector<8x32xf32>
    %309 = math.tanh %308 : vector<8x32xf32>
    %cst_72 = arith.constant 1.000000e+00 : f32
    %310 = vector.broadcast %cst_72 : f32 to vector<8x32xf32>
    %311 = arith.subf %310, %301 : vector<8x32xf32>
    %312 = arith.mulf %311, %309 : vector<8x32xf32>
    %313 = arith.mulf %301, %281 : vector<8x32xf32>
    %314 = arith.addf %312, %313 : vector<8x32xf32>
    %cst_73 = arith.constant dense<0.000000e+00> : vector<8x128xf32>
    %315 = tpu.matmul %314, %83, %cst_73 {dimension_numbers = #tpu.dot_dimension_numbers<[1], [0], [0], [1], [0, 0, 1, 1], [], []>} : vector<8x32xf32>, vector<32x128xf32>, vector<8x128xf32> -> vector<8x128xf32>
    %316 = vector.extract_strided_slice %49 {offsets = [56, 0], sizes = [8, 96], strides = [1, 1]} : vector<88x96xf32> to vector<8x96xf32>
    %317 = vector.extract_strided_slice %315 {offsets = [0, 0], sizes = [8, 96], strides = [1, 1]} : vector<8x128xf32> to vector<8x96xf32>
    %318 = vector.extract_strided_slice %315 {offsets = [0, 96], sizes = [8, 32], strides = [1, 1]} : vector<8x128xf32> to vector<8x32xf32>
    %319 = vector.extract_strided_slice %316 {offsets = [0, 0], sizes = [8, 32], strides = [1, 1]} : vector<8x96xf32> to vector<8x32xf32>
    %320 = vector.extract_strided_slice %317 {offsets = [0, 0], sizes = [8, 32], strides = [1, 1]} : vector<8x96xf32> to vector<8x32xf32>
    %321 = arith.addf %319, %320 : vector<8x32xf32>
    %322 = arith.negf %321 : vector<8x32xf32>
    %323 = math.exp %322 : vector<8x32xf32>
    %cst_74 = arith.constant 1.000000e+00 : f32
    %324 = vector.broadcast %cst_74 : f32 to vector<8x32xf32>
    %325 = arith.addf %324, %323 : vector<8x32xf32>
    %326 = arith.divf %324, %325 : vector<8x32xf32>
    %327 = vector.extract_strided_slice %316 {offsets = [0, 32], sizes = [8, 32], strides = [1, 1]} : vector<8x96xf32> to vector<8x32xf32>
    %328 = vector.extract_strided_slice %317 {offsets = [0, 32], sizes = [8, 32], strides = [1, 1]} : vector<8x96xf32> to vector<8x32xf32>
    %329 = arith.addf %327, %328 : vector<8x32xf32>
    %330 = arith.negf %329 : vector<8x32xf32>
    %331 = math.exp %330 : vector<8x32xf32>
    %cst_75 = arith.constant 1.000000e+00 : f32
    %332 = vector.broadcast %cst_75 : f32 to vector<8x32xf32>
    %333 = arith.addf %332, %331 : vector<8x32xf32>
    %334 = arith.divf %332, %333 : vector<8x32xf32>
    %335 = vector.extract_strided_slice %316 {offsets = [0, 64], sizes = [8, 32], strides = [1, 1]} : vector<8x96xf32> to vector<8x32xf32>
    %336 = arith.addf %335, %318 : vector<8x32xf32>
    %337 = vector.extract_strided_slice %317 {offsets = [0, 64], sizes = [8, 32], strides = [1, 1]} : vector<8x96xf32> to vector<8x32xf32>
    %338 = vector.broadcast %0 : vector<1x32xf32> to vector<8x32xf32>
    %339 = arith.addf %337, %338 : vector<8x32xf32>
    %340 = arith.mulf %326, %339 : vector<8x32xf32>
    %341 = arith.addf %336, %340 : vector<8x32xf32>
    %342 = math.tanh %341 : vector<8x32xf32>
    %cst_76 = arith.constant 1.000000e+00 : f32
    %343 = vector.broadcast %cst_76 : f32 to vector<8x32xf32>
    %344 = arith.subf %343, %334 : vector<8x32xf32>
    %345 = arith.mulf %344, %342 : vector<8x32xf32>
    %346 = arith.mulf %334, %314 : vector<8x32xf32>
    %347 = arith.addf %345, %346 : vector<8x32xf32>
    %cst_77 = arith.constant dense<0.000000e+00> : vector<8x128xf32>
    %348 = tpu.matmul %347, %83, %cst_77 {dimension_numbers = #tpu.dot_dimension_numbers<[1], [0], [0], [1], [0, 0, 1, 1], [], []>} : vector<8x32xf32>, vector<32x128xf32>, vector<8x128xf32> -> vector<8x128xf32>
    %349 = vector.extract_strided_slice %49 {offsets = [64, 0], sizes = [8, 96], strides = [1, 1]} : vector<88x96xf32> to vector<8x96xf32>
    %350 = vector.extract_strided_slice %348 {offsets = [0, 0], sizes = [8, 96], strides = [1, 1]} : vector<8x128xf32> to vector<8x96xf32>
    %351 = vector.extract_strided_slice %348 {offsets = [0, 96], sizes = [8, 32], strides = [1, 1]} : vector<8x128xf32> to vector<8x32xf32>
    %352 = vector.extract_strided_slice %349 {offsets = [0, 0], sizes = [8, 32], strides = [1, 1]} : vector<8x96xf32> to vector<8x32xf32>
    %353 = vector.extract_strided_slice %350 {offsets = [0, 0], sizes = [8, 32], strides = [1, 1]} : vector<8x96xf32> to vector<8x32xf32>
    %354 = arith.addf %352, %353 : vector<8x32xf32>
    %355 = arith.negf %354 : vector<8x32xf32>
    %356 = math.exp %355 : vector<8x32xf32>
    %cst_78 = arith.constant 1.000000e+00 : f32
    %357 = vector.broadcast %cst_78 : f32 to vector<8x32xf32>
    %358 = arith.addf %357, %356 : vector<8x32xf32>
    %359 = arith.divf %357, %358 : vector<8x32xf32>
    %360 = vector.extract_strided_slice %349 {offsets = [0, 32], sizes = [8, 32], strides = [1, 1]} : vector<8x96xf32> to vector<8x32xf32>
    %361 = vector.extract_strided_slice %350 {offsets = [0, 32], sizes = [8, 32], strides = [1, 1]} : vector<8x96xf32> to vector<8x32xf32>
    %362 = arith.addf %360, %361 : vector<8x32xf32>
    %363 = arith.negf %362 : vector<8x32xf32>
    %364 = math.exp %363 : vector<8x32xf32>
    %cst_79 = arith.constant 1.000000e+00 : f32
    %365 = vector.broadcast %cst_79 : f32 to vector<8x32xf32>
    %366 = arith.addf %365, %364 : vector<8x32xf32>
    %367 = arith.divf %365, %366 : vector<8x32xf32>
    %368 = vector.extract_strided_slice %349 {offsets = [0, 64], sizes = [8, 32], strides = [1, 1]} : vector<8x96xf32> to vector<8x32xf32>
    %369 = arith.addf %368, %351 : vector<8x32xf32>
    %370 = vector.extract_strided_slice %350 {offsets = [0, 64], sizes = [8, 32], strides = [1, 1]} : vector<8x96xf32> to vector<8x32xf32>
    %371 = vector.broadcast %0 : vector<1x32xf32> to vector<8x32xf32>
    %372 = arith.addf %370, %371 : vector<8x32xf32>
    %373 = arith.mulf %359, %372 : vector<8x32xf32>
    %374 = arith.addf %369, %373 : vector<8x32xf32>
    %375 = math.tanh %374 : vector<8x32xf32>
    %cst_80 = arith.constant 1.000000e+00 : f32
    %376 = vector.broadcast %cst_80 : f32 to vector<8x32xf32>
    %377 = arith.subf %376, %367 : vector<8x32xf32>
    %378 = arith.mulf %377, %375 : vector<8x32xf32>
    %379 = arith.mulf %367, %347 : vector<8x32xf32>
    %380 = arith.addf %378, %379 : vector<8x32xf32>
    %cst_81 = arith.constant dense<0.000000e+00> : vector<8x128xf32>
    %381 = tpu.matmul %380, %83, %cst_81 {dimension_numbers = #tpu.dot_dimension_numbers<[1], [0], [0], [1], [0, 0, 1, 1], [], []>} : vector<8x32xf32>, vector<32x128xf32>, vector<8x128xf32> -> vector<8x128xf32>
    %382 = vector.extract_strided_slice %49 {offsets = [72, 0], sizes = [8, 96], strides = [1, 1]} : vector<88x96xf32> to vector<8x96xf32>
    %383 = vector.extract_strided_slice %381 {offsets = [0, 0], sizes = [8, 96], strides = [1, 1]} : vector<8x128xf32> to vector<8x96xf32>
    %384 = vector.extract_strided_slice %381 {offsets = [0, 96], sizes = [8, 32], strides = [1, 1]} : vector<8x128xf32> to vector<8x32xf32>
    %385 = vector.extract_strided_slice %382 {offsets = [0, 0], sizes = [8, 32], strides = [1, 1]} : vector<8x96xf32> to vector<8x32xf32>
    %386 = vector.extract_strided_slice %383 {offsets = [0, 0], sizes = [8, 32], strides = [1, 1]} : vector<8x96xf32> to vector<8x32xf32>
    %387 = arith.addf %385, %386 : vector<8x32xf32>
    %388 = arith.negf %387 : vector<8x32xf32>
    %389 = math.exp %388 : vector<8x32xf32>
    %cst_82 = arith.constant 1.000000e+00 : f32
    %390 = vector.broadcast %cst_82 : f32 to vector<8x32xf32>
    %391 = arith.addf %390, %389 : vector<8x32xf32>
    %392 = arith.divf %390, %391 : vector<8x32xf32>
    %393 = vector.extract_strided_slice %382 {offsets = [0, 32], sizes = [8, 32], strides = [1, 1]} : vector<8x96xf32> to vector<8x32xf32>
    %394 = vector.extract_strided_slice %383 {offsets = [0, 32], sizes = [8, 32], strides = [1, 1]} : vector<8x96xf32> to vector<8x32xf32>
    %395 = arith.addf %393, %394 : vector<8x32xf32>
    %396 = arith.negf %395 : vector<8x32xf32>
    %397 = math.exp %396 : vector<8x32xf32>
    %cst_83 = arith.constant 1.000000e+00 : f32
    %398 = vector.broadcast %cst_83 : f32 to vector<8x32xf32>
    %399 = arith.addf %398, %397 : vector<8x32xf32>
    %400 = arith.divf %398, %399 : vector<8x32xf32>
    %401 = vector.extract_strided_slice %382 {offsets = [0, 64], sizes = [8, 32], strides = [1, 1]} : vector<8x96xf32> to vector<8x32xf32>
    %402 = arith.addf %401, %384 : vector<8x32xf32>
    %403 = vector.extract_strided_slice %383 {offsets = [0, 64], sizes = [8, 32], strides = [1, 1]} : vector<8x96xf32> to vector<8x32xf32>
    %404 = vector.broadcast %0 : vector<1x32xf32> to vector<8x32xf32>
    %405 = arith.addf %403, %404 : vector<8x32xf32>
    %406 = arith.mulf %392, %405 : vector<8x32xf32>
    %407 = arith.addf %402, %406 : vector<8x32xf32>
    %408 = math.tanh %407 : vector<8x32xf32>
    %cst_84 = arith.constant 1.000000e+00 : f32
    %409 = vector.broadcast %cst_84 : f32 to vector<8x32xf32>
    %410 = arith.subf %409, %400 : vector<8x32xf32>
    %411 = arith.mulf %410, %408 : vector<8x32xf32>
    %412 = arith.mulf %400, %380 : vector<8x32xf32>
    %413 = arith.addf %411, %412 : vector<8x32xf32>
    %cst_85 = arith.constant dense<0.000000e+00> : vector<8x128xf32>
    %414 = tpu.matmul %413, %83, %cst_85 {dimension_numbers = #tpu.dot_dimension_numbers<[1], [0], [0], [1], [0, 0, 1, 1], [], []>} : vector<8x32xf32>, vector<32x128xf32>, vector<8x128xf32> -> vector<8x128xf32>
    %415 = vector.extract_strided_slice %49 {offsets = [80, 0], sizes = [8, 96], strides = [1, 1]} : vector<88x96xf32> to vector<8x96xf32>
    %416 = vector.extract_strided_slice %414 {offsets = [0, 0], sizes = [8, 96], strides = [1, 1]} : vector<8x128xf32> to vector<8x96xf32>
    %417 = vector.extract_strided_slice %414 {offsets = [0, 96], sizes = [8, 32], strides = [1, 1]} : vector<8x128xf32> to vector<8x32xf32>
    %418 = vector.extract_strided_slice %415 {offsets = [0, 0], sizes = [8, 32], strides = [1, 1]} : vector<8x96xf32> to vector<8x32xf32>
    %419 = vector.extract_strided_slice %416 {offsets = [0, 0], sizes = [8, 32], strides = [1, 1]} : vector<8x96xf32> to vector<8x32xf32>
    %420 = arith.addf %418, %419 : vector<8x32xf32>
    %421 = arith.negf %420 : vector<8x32xf32>
    %422 = math.exp %421 : vector<8x32xf32>
    %cst_86 = arith.constant 1.000000e+00 : f32
    %423 = vector.broadcast %cst_86 : f32 to vector<8x32xf32>
    %424 = arith.addf %423, %422 : vector<8x32xf32>
    %425 = arith.divf %423, %424 : vector<8x32xf32>
    %426 = vector.extract_strided_slice %415 {offsets = [0, 32], sizes = [8, 32], strides = [1, 1]} : vector<8x96xf32> to vector<8x32xf32>
    %427 = vector.extract_strided_slice %416 {offsets = [0, 32], sizes = [8, 32], strides = [1, 1]} : vector<8x96xf32> to vector<8x32xf32>
    %428 = arith.addf %426, %427 : vector<8x32xf32>
    %429 = arith.negf %428 : vector<8x32xf32>
    %430 = math.exp %429 : vector<8x32xf32>
    %cst_87 = arith.constant 1.000000e+00 : f32
    %431 = vector.broadcast %cst_87 : f32 to vector<8x32xf32>
    %432 = arith.addf %431, %430 : vector<8x32xf32>
    %433 = arith.divf %431, %432 : vector<8x32xf32>
    %434 = vector.extract_strided_slice %415 {offsets = [0, 64], sizes = [8, 32], strides = [1, 1]} : vector<8x96xf32> to vector<8x32xf32>
    %435 = arith.addf %434, %417 : vector<8x32xf32>
    %436 = vector.extract_strided_slice %416 {offsets = [0, 64], sizes = [8, 32], strides = [1, 1]} : vector<8x96xf32> to vector<8x32xf32>
    %437 = vector.broadcast %0 : vector<1x32xf32> to vector<8x32xf32>
    %438 = arith.addf %436, %437 : vector<8x32xf32>
    %439 = arith.mulf %425, %438 : vector<8x32xf32>
    %440 = arith.addf %435, %439 : vector<8x32xf32>
    %441 = math.tanh %440 : vector<8x32xf32>
    %cst_88 = arith.constant 1.000000e+00 : f32
    %442 = vector.broadcast %cst_88 : f32 to vector<8x32xf32>
    %443 = arith.subf %442, %433 : vector<8x32xf32>
    %444 = arith.mulf %443, %441 : vector<8x32xf32>
    %445 = arith.mulf %433, %413 : vector<8x32xf32>
    %446 = arith.addf %444, %445 : vector<8x32xf32>
    %447 = tpu.concatenate %82, %116, %149, %182, %215, %248, %281, %314, %347, %380, %413, %446 in 0 : vector<8x32xf32>, vector<8x32xf32>, vector<8x32xf32>, vector<8x32xf32>, vector<8x32xf32>, vector<8x32xf32>, vector<8x32xf32>, vector<8x32xf32>, vector<8x32xf32>, vector<8x32xf32>, vector<8x32xf32>, vector<8x32xf32> -> vector<96x32xf32>
    %c0_89 = arith.constant 0 : index
    %c0_90 = arith.constant 0 : index
    %448 = vector.load %arg8[%c0_89, %c0_90] : memref<32x1xf32, #tpu.memory_space<vmem>>, vector<32x1xf32>
    %cst_91 = arith.constant dense<0.000000e+00> : vector<96x1xf32>
    %449 = tpu.matmul %447, %448, %cst_91 {dimension_numbers = #tpu.dot_dimension_numbers<[1], [0], [0], [1], [0, 0, 1, 1], [], []>} : vector<96x32xf32>, vector<32x1xf32>, vector<96x1xf32> -> vector<96x1xf32>
    %c0_92 = arith.constant 0 : index
    %c0_93 = arith.constant 0 : index
    %450 = vector.load %arg9[%c0_92, %c0_93] : memref<1x1xf32, #tpu.memory_space<vmem>>, vector<1x1xf32>
    %451 = vector.broadcast %450 : vector<1x1xf32> to vector<96x1xf32>
    %452 = arith.addf %449, %451 : vector<96x1xf32>
    %c0_94 = arith.constant 0 : index
    %c0_95 = arith.constant 0 : index
    %453 = vector.load %arg10[%c0_94, %c0_95] : memref<96x1xf32, #tpu.memory_space<vmem>>, vector<96x1xf32>
    tpu.vector_store %arg10[%c0_94, %c0_95], %452 {strides = array<i32>} : memref<96x1xf32, #tpu.memory_space<vmem>>, vector<96x1xf32>,
    return
  }
}

</mosaic_0001>

<llo_original>
// kernel: tpu_custom_call.1
$region0: #{tpu_custom_call.1}
  #allocation0 [shape = 'u32[]', space=smem, size = 0x4, offset = 0x4, fixed_abs, tag = 'smem constant byte address 0x4 - core index']
  #allocation1 [shape = 'u32[144,128]{1,0:T(1,128)}', space=vmem, size = 0x12000, scoped, tag = 'internal scratch']
  #allocation2 [shape = 'f32[1,1]{1,0:T(1,128)S(1)}', space=vmem, size = 0x200, scoped, tag = 'scoped memory for tpu_custom_call.1']
  %s0 = inlined_call_operand.vmem [shape: f32[13,8,4], index: 0, kind: input, shape index: {}]
  %s1 = inlined_call_operand.vmem [shape: f32[8,32], index: 1, kind: input, shape index: {}]
  %s2 = inlined_call_operand.vmem [shape: f32[4,96], index: 2, kind: input, shape index: {}]
  %s3 = inlined_call_operand.vmem [shape: f32[32,96], index: 3, kind: input, shape index: {}]
  %s4 = inlined_call_operand.vmem [shape: f32[32,128], index: 4, kind: input, shape index: {}]
  %s5 = inlined_call_operand.vmem [shape: f32[1,96], index: 5, kind: input, shape index: {}]
  %s6 = inlined_call_operand.vmem [shape: f32[1,96], index: 6, kind: input, shape index: {}]
  %s7 = inlined_call_operand.vmem [shape: f32[1,32], index: 7, kind: input, shape index: {}]
  %s8 = inlined_call_operand.vmem [shape: f32[32,1], index: 8, kind: input, shape index: {}]
  %s9 = inlined_call_operand.<no memory space> [shape: f32[1,1], index: 9, kind: input, shape index: {}]
  %s10 = inlined_call_operand.vmem [shape: f32[96,1], index: 10, kind: output, shape index: {}]
  %s11 = sld [smem:[#allocation0]]
  $region50: #{tpu_custom_call.1} parent=0
    _
  %s13 = ssub.s32 1, %s11
  %s14 = scalar_select 0, %s13, %s11
  %v15 = vstv %s9
  %16 = vst [vmem:[#allocation2] sm:$0x1] %v15
  // Predicated region
  $region2: #{tpu_custom_call.1} parent=0 // pred_check
    _
  $region3: #{tpu_custom_call.1} parent=0 // pred_check_branch
    %18 = sbr.rel (0) target = $region5
  $region4: #{tpu_custom_call.1} parent=0 // pred_region
    _
  $region5: #{tpu_custom_call.1} parent=0 // pred_fallthru
    _
  // Predicated region
  $region6: #{tpu_custom_call.1} parent=0 // pred_check
    _
  $region7: #{tpu_custom_call.1} parent=0 // pred_check_branch
    %20 = sbr.rel (0) target = $region9
  $region8: #{tpu_custom_call.1} parent=0 // pred_region
    _
  $region9: #{tpu_custom_call.1} parent=0 // pred_fallthru
    _
  // Predicated region
  $region10: #{tpu_custom_call.1} parent=0 // pred_check
    _
  $region11: #{tpu_custom_call.1} parent=0 // pred_check_branch
    %22 = sbr.rel (0) target = $region13
  $region12: #{tpu_custom_call.1} parent=0 // pred_region
    _
  $region13: #{tpu_custom_call.1} parent=0 // pred_fallthru
    _
  // Predicated region
  $region14: #{tpu_custom_call.1} parent=0 // pred_check
    _
  $region15: #{tpu_custom_call.1} parent=0 // pred_check_branch
    %24 = sbr.rel (0) target = $region17
  $region16: #{tpu_custom_call.1} parent=0 // pred_region
    _
  $region17: #{tpu_custom_call.1} parent=0 // pred_fallthru
    _
  // Predicated region
  $region18: #{tpu_custom_call.1} parent=0 // pred_check
    _
  $region19: #{tpu_custom_call.1} parent=0 // pred_check_branch
    %26 = sbr.rel (0) target = $region21
  $region20: #{tpu_custom_call.1} parent=0 // pred_region
    _
  $region21: #{tpu_custom_call.1} parent=0 // pred_fallthru
    _
  // Predicated region
  $region22: #{tpu_custom_call.1} parent=0 // pred_check
    _
  $region23: #{tpu_custom_call.1} parent=0 // pred_check_branch
    %28 = sbr.rel (0) target = $region25
  $region24: #{tpu_custom_call.1} parent=0 // pred_region
    _
  $region25: #{tpu_custom_call.1} parent=0 // pred_fallthru
    _
  // Predicated region
  $region26: #{tpu_custom_call.1} parent=0 // pred_check
    _
  $region27: #{tpu_custom_call.1} parent=0 // pred_check_branch
    %30 = sbr.rel (0) target = $region29
  $region28: #{tpu_custom_call.1} parent=0 // pred_region
    _
  $region29: #{tpu_custom_call.1} parent=0 // pred_fallthru
    _
  // Predicated region
  $region30: #{tpu_custom_call.1} parent=0 // pred_check
    _
  $region31: #{tpu_custom_call.1} parent=0 // pred_check_branch
    %32 = sbr.rel (0) target = $region33
  $region32: #{tpu_custom_call.1} parent=0 // pred_region
    _
  $region33: #{tpu_custom_call.1} parent=0 // pred_fallthru
    _
  // Predicated region
  $region34: #{tpu_custom_call.1} parent=0 // pred_check
    _
  $region35: #{tpu_custom_call.1} parent=0 // pred_check_branch
    %34 = sbr.rel (0) target = $region37
  $region36: #{tpu_custom_call.1} parent=0 // pred_region
    _
  $region37: #{tpu_custom_call.1} parent=0 // pred_fallthru
    _
  // Predicated region
  $region38: #{tpu_custom_call.1} parent=0 // pred_check
    _
  $region39: #{tpu_custom_call.1} parent=0 // pred_check_branch
    %36 = sbr.rel (0) target = $region41
  $region40: #{tpu_custom_call.1} parent=0 // pred_region
    _
  $region41: #{tpu_custom_call.1} parent=0 // pred_fallthru
    _
  %v37 = vld [vmem:[%s7] sm:$0x1]
  %v38 = vld [vmem:[%s2] sm:$0xf]
  %v39 = vld [vmem:[%s0] sm:$0xff]
  %vm40 = vcmp.ne.f32.partialorder %v39, %v39
  %v41 = vsel %vm40, 0.0, %v39
  %v42 = vld [vmem:[%s5] sm:$0x1]
  %v44 = vlaneseq
  %v45 = vshrl.u32 %v44, 7
  %v46 = vsub.s32 0, %v45
  %v47 = vrot.slane %v42, %v46
  %vm49 = vcmask 31744
  %v51 = vsel %vm49, %v41, 0
  %vm53 = vcmask 1043456
  %v55 = vsel %vm53, %v38, 0
  %57 = vmatprep.subr.mxu0 0.0
  %58 = vmatpush1.msra.mxu0 0.0
  %59 = vmatprep.subr.mxu0 0.0
  %60 = vmatpush1.msra.mxu0 0.0
  %61 = vmatprep.subr.mxu0 0.0
  %62 = vmatpush1.msra.mxu0 0.0
  %63 = vmatprep.subr.mxu0 0.0
  %64 = vmatpush1.msra.mxu0 0.0
  %65 = vmatprep.subr.mxu0 0.0
  %66 = vmatpush1.msra.mxu0 0.0
  %67 = vmatprep.subr.mxu0 0.0
  %68 = vmatpush1.msra.mxu0 0.0
  %69 = vmatprep.subr.mxu0 0.0
  %70 = vmatpush1.msra.mxu0 0.0
  %71 = vmatprep.subr.mxu0 0.0
  %72 = vmatpush1.msra.mxu0 0.0
  %73 = vmatprep.subr.mxu0 0.0
  %74 = vmatpush1.msra.mxu0 0.0
  %75 = vmatprep.subr.mxu0 0.0
  %76 = vmatpush1.msra.mxu0 0.0
  %77 = vmatprep.subr.mxu0 0.0
  %78 = vmatpush1.msra.mxu0 0.0
  %79 = vmatprep.subr.mxu0 0.0
  %80 = vmatpush1.msra.mxu0 0.0
  %81 = vmatprep.subr.mxu0 0.0
  %82 = vmatpush1.msra.mxu0 0.0
  %83 = vmatprep.subr.mxu0 0.0
  %84 = vmatpush1.msra.mxu0 0.0
  %85 = vmatprep.subr.mxu0 0.0
  %86 = vmatpush1.msra.mxu0 0.0
  %87 = vmatprep.subr.mxu0 0.0
  %88 = vmatpush1.msra.mxu0 %v55
  %89 = vmatprep.subr.mxu0 0.0
  %90 = vmatpush2.msra.mxu0 0.0
  %91 = vmatprep.subr.mxu0 0.0
  %92 = vmatpush2.msra.mxu0 0.0
  %93 = vmatprep.subr.mxu0 0.0
  %94 = vmatpush2.msra.mxu0 0.0
  %95 = vmatprep.subr.mxu0 0.0
  %96 = vmatpush2.msra.mxu0 0.0
  %97 = vmatprep.subr.mxu0 0.0
  %98 = vmatpush2.msra.mxu0 0.0
  %99 = vmatprep.subr.mxu0 0.0
  %100 = vmatpush2.msra.mxu0 0.0
  %101 = vmatprep.subr.mxu0 0.0
  %102 = vmatpush2.msra.mxu0 0.0
  %103 = vmatprep.subr.mxu0 0.0
  %104 = vmatpush2.msra.mxu0 0.0
  %105 = vmatprep.subr.mxu0 0.0
  %106 = vmatpush2.msra.mxu0 0.0
  %107 = vmatprep.subr.mxu0 0.0
  %108 = vmatpush2.msra.mxu0 0.0
  %109 = vmatprep.subr.mxu0 0.0
  %110 = vmatpush2.msra.mxu0 0.0
  %111 = vmatprep.subr.mxu0 0.0
  %112 = vmatpush2.msra.mxu0 0.0
  %113 = vmatprep.subr.mxu0 0.0
  %114 = vmatpush2.msra.mxu0 0.0
  %115 = vmatprep.subr.mxu0 0.0
  %116 = vmatpush2.msra.mxu0 0.0
  %117 = vmatprep.subr.mxu0 0.0
  %118 = vmatpush2.msra.mxu0 0.0
  %119 = vmatprep.subr.mxu0 0.0
  %120 = vmatpush2.msra.mxu0 0.0
  %121 = vmatprep.mubr.f32.mxu0 0.0
  %122 = vmatmul.mubr.f32.gmra.mxu0 %v51
  %v123 = vpop.f32.mrf.mxu0
  %v124 = vadd.f32 %v47, %v123
  %v125 = vpop.f32.mrf.mxu0
  %126 = vdwg.mxu0
  %s127 = scalar_lea.vmem %s0, 8
  %v128 = vld [vmem:[%s127] sm:$0xff]
  %s129 = scalar_lea.vmem %s0, 16
  %v130 = vld [vmem:[%s129] sm:$0xff]
  %s131 = scalar_lea.vmem %s0, 24
  %v132 = vld [vmem:[%s131] sm:$0xff]
  %s133 = scalar_lea.vmem %s0, 32
  %v134 = vld [vmem:[%s133] sm:$0xff]
  %s135 = scalar_lea.vmem %s0, 40
  %v136 = vld [vmem:[%s135] sm:$0xff]
  %s137 = scalar_lea.vmem %s0, 48
  %v138 = vld [vmem:[%s137] sm:$0xff]
  %s139 = scalar_lea.vmem %s0, 56
  %v140 = vld [vmem:[%s139] sm:$0xff]
  %s141 = scalar_lea.vmem %s0, 64
  %v142 = vld [vmem:[%s141] sm:$0xff]
  %s143 = scalar_lea.vmem %s0, 72
  %v144 = vld [vmem:[%s143] sm:$0xff]
  %s145 = scalar_lea.vmem %s0, 80
  %v146 = vld [vmem:[%s145] sm:$0xff]
  %s147 = scalar_lea.vmem %s0, 88
  %v148 = vld [vmem:[%s147] sm:$0xff]
  %v149 = vld [vmem:[%s6] sm:$0x1]
  %v151 = vlaneseq
  %v152 = vshrl.u32 %v151, 7
  %v153 = vsub.s32 0, %v152
  %v154 = vrot.slane %v149, %v153
  %167 = vrot.lane.b32.xlu0 %v128, 127
  %v168 = vpop.permute.xlu0 %167
  %169 = vrot.lane.b32.xlu0 %v130, 127
  %v170 = vpop.permute.xlu0 %169
  %171 = vrot.lane.b32.xlu0 %v132, 127
  %v172 = vpop.permute.xlu0 %171
  %173 = vrot.lane.b32.xlu0 %v134, 127
  %v174 = vpop.permute.xlu0 %173
  %175 = vrot.lane.b32.xlu0 %v136, 127
  %v176 = vpop.permute.xlu0 %175
  %177 = vrot.lane.b32.xlu0 %v138, 127
  %v178 = vpop.permute.xlu0 %177
  %179 = vrot.lane.b32.xlu0 %v140, 127
  %v180 = vpop.permute.xlu0 %179
  %181 = vrot.lane.b32.xlu0 %v142, 127
  %v182 = vpop.permute.xlu0 %181
  %183 = vrot.lane.b32.xlu0 %v144, 127
  %v184 = vpop.permute.xlu0 %183
  %185 = vrot.lane.b32.xlu0 %v146, 127
  %v186 = vpop.permute.xlu0 %185
  %187 = vrot.lane.b32.xlu0 %v148, 127
  %v188 = vpop.permute.xlu0 %187
  %vm189 = vcmask 23552
  %v190 = vsel %vm189, %v168, 0
  %v192 = vsel %vm189, %v170, 0
  %v194 = vsel %vm189, %v172, 0
  %v196 = vsel %vm189, %v174, 0
  %v198 = vsel %vm189, %v176, 0
  %v200 = vsel %vm189, %v178, 0
  %v202 = vsel %vm189, %v180, 0
  %v204 = vsel %vm189, %v182, 0
  %v206 = vsel %vm189, %v184, 0
  %v208 = vsel %vm189, %v186, 0
  %v210 = vsel %vm189, %v188, 0
  %vm212 = vcmask 1042432
  %v213 = vsel %vm212, %v38, 0
  %215 = vmatprep.subr.mxu0 0.0
  %216 = vmatpush1.msra.mxu0 0.0
  %217 = vmatprep.subr.mxu0 0.0
  %218 = vmatpush1.msra.mxu0 0.0
  %219 = vmatprep.subr.mxu0 0.0
  %220 = vmatpush1.msra.mxu0 0.0
  %221 = vmatprep.subr.mxu0 0.0
  %222 = vmatpush1.msra.mxu0 0.0
  %223 = vmatprep.subr.mxu0 0.0
  %224 = vmatpush1.msra.mxu0 0.0
  %225 = vmatprep.subr.mxu0 0.0
  %226 = vmatpush1.msra.mxu0 0.0
  %227 = vmatprep.subr.mxu0 0.0
  %228 = vmatpush1.msra.mxu0 0.0
  %229 = vmatprep.subr.mxu0 0.0
  %230 = vmatpush1.msra.mxu0 0.0
  %231 = vmatprep.subr.mxu0 0.0
  %232 = vmatpush1.msra.mxu0 0.0
  %233 = vmatprep.subr.mxu0 0.0
  %234 = vmatpush1.msra.mxu0 0.0
  %235 = vmatprep.subr.mxu0 0.0
  %236 = vmatpush1.msra.mxu0 0.0
  %237 = vmatprep.subr.mxu0 0.0
  %238 = vmatpush1.msra.mxu0 0.0
  %239 = vmatprep.subr.mxu0 0.0
  %240 = vmatpush1.msra.mxu0 0.0
  %241 = vmatprep.subr.mxu0 0.0
  %242 = vmatpush1.msra.mxu0 0.0
  %243 = vmatprep.subr.mxu0 0.0
  %244 = vmatpush1.msra.mxu0 0.0
  %245 = vmatprep.subr.mxu0 0.0
  %246 = vmatpush1.msra.mxu0 %v213
  %247 = vmatprep.subr.mxu0 0.0
  %248 = vmatpush2.msra.mxu0 0.0
  %249 = vmatprep.subr.mxu0 0.0
  %250 = vmatpush2.msra.mxu0 0.0
  %251 = vmatprep.subr.mxu0 0.0
  %252 = vmatpush2.msra.mxu0 0.0
  %253 = vmatprep.subr.mxu0 0.0
  %254 = vmatpush2.msra.mxu0 0.0
  %255 = vmatprep.subr.mxu0 0.0
  %256 = vmatpush2.msra.mxu0 0.0
  %257 = vmatprep.subr.mxu0 0.0
  %258 = vmatpush2.msra.mxu0 0.0
  %259 = vmatprep.subr.mxu0 0.0
  %260 = vmatpush2.msra.mxu0 0.0
  %261 = vmatprep.subr.mxu0 0.0
  %262 = vmatpush2.msra.mxu0 0.0
  %263 = vmatprep.subr.mxu0 0.0
  %264 = vmatpush2.msra.mxu0 0.0
  %265 = vmatprep.subr.mxu0 0.0
  %266 = vmatpush2.msra.mxu0 0.0
  %267 = vmatprep.subr.mxu0 0.0
  %268 = vmatpush2.msra.mxu0 0.0
  %269 = vmatprep.subr.mxu0 0.0
  %270 = vmatpush2.msra.mxu0 0.0
  %271 = vmatprep.subr.mxu0 0.0
  %272 = vmatpush2.msra.mxu0 0.0
  %273 = vmatprep.subr.mxu0 0.0
  %274 = vmatpush2.msra.mxu0 0.0
  %275 = vmatprep.subr.mxu0 0.0
  %276 = vmatpush2.msra.mxu0 0.0
  %277 = vmatprep.subr.mxu0 0.0
  %278 = vmatpush2.msra.mxu0 0.0
  %279 = vmatprep.mubr.f32.mxu0 0.0
  %280 = vmatmul.mubr.f32.gmra.mxu0 %v190
  %v281 = vpop.f32.mrf.mxu0
  %v282 = vadd.f32 %v154, %v281
  %v283 = vpop.f32.mrf.mxu0
  %284 = vmatprep.mubr.f32.mxu0 0.0
  %285 = vmatmul.mubr.f32.gmra.mxu0 %v192
  %v286 = vpop.f32.mrf.mxu0
  %v287 = vadd.f32 %v154, %v286
  %v288 = vpop.f32.mrf.mxu0
  %289 = vmatprep.mubr.f32.mxu0 0.0
  %290 = vmatmul.mubr.f32.gmra.mxu0 %v194
  %v291 = vpop.f32.mrf.mxu0
  %v292 = vadd.f32 %v154, %v291
  %v293 = vpop.f32.mrf.mxu0
  %294 = vmatprep.mubr.f32.mxu0 0.0
  %295 = vmatmul.mubr.f32.gmra.mxu0 %v196
  %v296 = vpop.f32.mrf.mxu0
  %v297 = vadd.f32 %v154, %v296
  %v298 = vpop.f32.mrf.mxu0
  %299 = vmatprep.mubr.f32.mxu0 0.0
  %300 = vmatmul.mubr.f32.gmra.mxu0 %v198
  %v301 = vpop.f32.mrf.mxu0
  %v302 = vadd.f32 %v154, %v301
  %v303 = vpop.f32.mrf.mxu0
  %304 = vmatprep.mubr.f32.mxu0 0.0
  %305 = vmatmul.mubr.f32.gmra.mxu0 %v200
  %v306 = vpop.f32.mrf.mxu0
  %v307 = vadd.f32 %v154, %v306
  %v308 = vpop.f32.mrf.mxu0
  %309 = vmatprep.mubr.f32.mxu0 0.0
  %310 = vmatmul.mubr.f32.gmra.mxu0 %v202
  %v311 = vpop.f32.mrf.mxu0
  %v312 = vadd.f32 %v154, %v311
  %v313 = vpop.f32.mrf.mxu0
  %314 = vmatprep.mubr.f32.mxu0 0.0
  %315 = vmatmul.mubr.f32.gmra.mxu0 %v204
  %v316 = vpop.f32.mrf.mxu0
  %v317 = vadd.f32 %v154, %v316
  %v318 = vpop.f32.mrf.mxu0
  %319 = vmatprep.mubr.f32.mxu0 0.0
  %320 = vmatmul.mubr.f32.gmra.mxu0 %v206
  %v321 = vpop.f32.mrf.mxu0
  %v322 = vadd.f32 %v154, %v321
  %v323 = vpop.f32.mrf.mxu0
  %324 = vmatprep.mubr.f32.mxu0 0.0
  %325 = vmatmul.mubr.f32.gmra.mxu0 %v208
  %v326 = vpop.f32.mrf.mxu0
  %v327 = vadd.f32 %v154, %v326
  %v328 = vpop.f32.mrf.mxu0
  %329 = vmatprep.mubr.f32.mxu0 0.0
  %330 = vmatmul.mubr.f32.gmra.mxu0 %v210
  %v331 = vpop.f32.mrf.mxu0
  %v332 = vadd.f32 %v154, %v331
  %v333 = vpop.f32.mrf.mxu0
  %334 = vdwg.mxu0
  %v335 = vld [vmem:[%s1] sm:$0xff]
  %v336 = vld [vmem:[%s3] sm:$0xff]
  %v337 = vld [vmem:[%s3 + $0x8] sm:$0xff]
  %v338 = vld [vmem:[%s3 + $0x10] sm:$0xff]
  %v339 = vld [vmem:[%s3 + $0x18] sm:$0xff]
  %vm340 = vcmask 261120
  %v342 = vsel %vm340, %v335, 0
  %344 = vmatprep.subr.mxu0 0.0
  %345 = vmatpush1.msra.mxu0 0.0
  %346 = vmatprep.subr.mxu0 0.0
  %347 = vmatpush1.msra.mxu0 0.0
  %348 = vmatprep.subr.mxu0 0.0
  %349 = vmatpush1.msra.mxu0 0.0
  %350 = vmatprep.subr.mxu0 0.0
  %351 = vmatpush1.msra.mxu0 0.0
  %352 = vmatprep.subr.mxu0 0.0
  %353 = vmatpush1.msra.mxu0 0.0
  %354 = vmatprep.subr.mxu0 0.0
  %355 = vmatpush1.msra.mxu0 0.0
  %356 = vmatprep.subr.mxu0 0.0
  %357 = vmatpush1.msra.mxu0 0.0
  %358 = vmatprep.subr.mxu0 0.0
  %359 = vmatpush1.msra.mxu0 0.0
  %360 = vmatprep.subr.mxu0 0.0
  %361 = vmatpush1.msra.mxu0 0.0
  %362 = vmatprep.subr.mxu0 0.0
  %363 = vmatpush1.msra.mxu0 0.0
  %364 = vmatprep.subr.mxu0 0.0
  %365 = vmatpush1.msra.mxu0 0.0
  %366 = vmatprep.subr.mxu0 0.0
  %367 = vmatpush1.msra.mxu0 0.0
  %368 = vmatprep.subr.mxu0 0.0
  %369 = vmatpush1.msra.mxu0 %v339
  %370 = vmatprep.subr.mxu0 0.0
  %371 = vmatpush1.msra.mxu0 %v338
  %372 = vmatprep.subr.mxu0 0.0
  %373 = vmatpush1.msra.mxu0 %v337
  %374 = vmatprep.subr.mxu0 0.0
  %375 = vmatpush1.msra.mxu0 %v336
  %376 = vmatprep.subr.mxu0 0.0
  %377 = vmatpush2.msra.mxu0 0.0
  %378 = vmatprep.subr.mxu0 0.0
  %379 = vmatpush2.msra.mxu0 0.0
  %380 = vmatprep.subr.mxu0 0.0
  %381 = vmatpush2.msra.mxu0 0.0
  %382 = vmatprep.subr.mxu0 0.0
  %383 = vmatpush2.msra.mxu0 0.0
  %384 = vmatprep.subr.mxu0 0.0
  %385 = vmatpush2.msra.mxu0 0.0
  %386 = vmatprep.subr.mxu0 0.0
  %387 = vmatpush2.msra.mxu0 0.0
  %388 = vmatprep.subr.mxu0 0.0
  %389 = vmatpush2.msra.mxu0 0.0
  %390 = vmatprep.subr.mxu0 0.0
  %391 = vmatpush2.msra.mxu0 0.0
  %392 = vmatprep.subr.mxu0 0.0
  %393 = vmatpush2.msra.mxu0 0.0
  %394 = vmatprep.subr.mxu0 0.0
  %395 = vmatpush2.msra.mxu0 0.0
  %396 = vmatprep.subr.mxu0 0.0
  %397 = vmatpush2.msra.mxu0 0.0
  %398 = vmatprep.subr.mxu0 0.0
  %399 = vmatpush2.msra.mxu0 0.0
  %400 = vmatprep.subr.mxu0 0.0
  %401 = vmatpush2.msra.mxu0 0.0
  %402 = vmatprep.subr.mxu0 0.0
  %403 = vmatpush2.msra.mxu0 0.0
  %404 = vmatprep.subr.mxu0 0.0
  %405 = vmatpush2.msra.mxu0 0.0
  %406 = vmatprep.subr.mxu0 0.0
  %407 = vmatpush2.msra.mxu0 0.0
  %408 = vmatprep.mubr.f32.mxu0 0.0
  %409 = vmatmul.mubr.f32.gmra.mxu0 %v342
  %v410 = vpop.f32.mrf.mxu0
  %v411 = vadd.f32 0.0, %v410
  %v412 = vpop.f32.mrf.mxu0
  %413 = vdwg.mxu0
  %v414 = vadd.f32 %v124, %v411
  %v415 = vxor.u32 %v414, 2147483648
  %v416 = vmul.f32 %v415, 1.442695
  %v417 = vpow.pop %v416
  %v418 = vadd.f32 %v417, 1.0
  %v419 = vrcp.pop %v418
  %v420 = vmul.f32 1.0, %v419
  %v421 = vadd.f32 %v124, 0.0
  %v423 = vlaneseq
  %v424 = vshrl.u32 %v423, 7
  %v425 = vsub.s32 0, %v424
  %v426 = vrot.slane %v37, %v425
  %427 = vrot.lane.b32.xlu0 %v426, 64
  %v428 = vpop.permute.xlu0 %427
  %v430 = vadd.f32 %v411, %v428
  %432 = vrot.lane.b32.xlu0 %v430, 64
  %v433 = vpop.permute.xlu0 %432
  %v435 = vmul.f32 %v420, %v433
  %437 = vrot.lane.b32.xlu0 %v435, 64
  %v438 = vpop.permute.xlu0 %437
  %v440 = vadd.f32 %v421, %v438
  %v441 = vtanh.pop %v440
  %v442 = vsub.f32 1.0, %v420
  %444 = vrot.lane.b32.xlu0 %v441, 96
  %v445 = vpop.permute.xlu0 %444
  %v447 = vmul.f32 %v442, %v445
  %448 = vrot.lane.b32.xlu0 %v335, 32
  %v449 = vpop.permute.xlu0 %448
  %v451 = vmul.f32 %v420, %v449
  %v452 = vadd.f32 %v447, %v451
  %v453 = vld [vmem:[%s4] sm:$0xff]
  %v454 = vld [vmem:[%s4 + $0x8] sm:$0xff]
  %v455 = vld [vmem:[%s4 + $0x10] sm:$0xff]
  %v456 = vld [vmem:[%s4 + $0x18] sm:$0xff]
  %458 = vrot.lane.b32.xlu0 %v452, 96
  %v459 = vpop.permute.xlu0 %458
  %v460 = vsel %vm340, %v459, 0
  %462 = vmatprep.subr.mxu0 0.0
  %463 = vmatpush1.msra.mxu0 0.0
  %464 = vmatprep.subr.mxu0 0.0
  %465 = vmatpush1.msra.mxu0 0.0
  %466 = vmatprep.subr.mxu0 0.0
  %467 = vmatpush1.msra.mxu0 0.0
  %468 = vmatprep.subr.mxu0 0.0
  %469 = vmatpush1.msra.mxu0 0.0
  %470 = vmatprep.subr.mxu0 0.0
  %471 = vmatpush1.msra.mxu0 0.0
  %472 = vmatprep.subr.mxu0 0.0
  %473 = vmatpush1.msra.mxu0 0.0
  %474 = vmatprep.subr.mxu0 0.0
  %475 = vmatpush1.msra.mxu0 0.0
  %476 = vmatprep.subr.mxu0 0.0
  %477 = vmatpush1.msra.mxu0 0.0
  %478 = vmatprep.subr.mxu0 0.0
  %479 = vmatpush1.msra.mxu0 0.0
  %480 = vmatprep.subr.mxu0 0.0
  %481 = vmatpush1.msra.mxu0 0.0
  %482 = vmatprep.subr.mxu0 0.0
  %483 = vmatpush1.msra.mxu0 0.0
  %484 = vmatprep.subr.mxu0 0.0
  %485 = vmatpush1.msra.mxu0 0.0
  %486 = vmatprep.subr.mxu0 0.0
  %487 = vmatpush1.msra.mxu0 %v456
  %488 = vmatprep.subr.mxu0 0.0
  %489 = vmatpush1.msra.mxu0 %v455
  %490 = vmatprep.subr.mxu0 0.0
  %491 = vmatpush1.msra.mxu0 %v454
  %492 = vmatprep.subr.mxu0 0.0
  %493 = vmatpush1.msra.mxu0 %v453
  %494 = vmatprep.subr.mxu0 0.0
  %495 = vmatpush2.msra.mxu0 0.0
  %496 = vmatprep.subr.mxu0 0.0
  %497 = vmatpush2.msra.mxu0 0.0
  %498 = vmatprep.subr.mxu0 0.0
  %499 = vmatpush2.msra.mxu0 0.0
  %500 = vmatprep.subr.mxu0 0.0
  %501 = vmatpush2.msra.mxu0 0.0
  %502 = vmatprep.subr.mxu0 0.0
  %503 = vmatpush2.msra.mxu0 0.0
  %504 = vmatprep.subr.mxu0 0.0
  %505 = vmatpush2.msra.mxu0 0.0
  %506 = vmatprep.subr.mxu0 0.0
  %507 = vmatpush2.msra.mxu0 0.0
  %508 = vmatprep.subr.mxu0 0.0
  %509 = vmatpush2.msra.mxu0 0.0
  %510 = vmatprep.subr.mxu0 0.0
  %511 = vmatpush2.msra.mxu0 0.0
  %512 = vmatprep.subr.mxu0 0.0
  %513 = vmatpush2.msra.mxu0 0.0
  %514 = vmatprep.subr.mxu0 0.0
  %515 = vmatpush2.msra.mxu0 0.0
  %516 = vmatprep.subr.mxu0 0.0
  %517 = vmatpush2.msra.mxu0 0.0
  %518 = vmatprep.subr.mxu0 0.0
  %519 = vmatpush2.msra.mxu0 0.0
  %520 = vmatprep.subr.mxu0 0.0
  %521 = vmatpush2.msra.mxu0 0.0
  %522 = vmatprep.subr.mxu0 0.0
  %523 = vmatpush2.msra.mxu0 0.0
  %524 = vmatprep.subr.mxu0 0.0
  %525 = vmatpush2.msra.mxu0 0.0
  %526 = vmatprep.mubr.f32.mxu0 0.0
  %527 = vmatmul.mubr.f32.gmra.mxu0 %v460
  %v528 = vpop.f32.mrf.mxu0
  %v529 = vadd.f32 0.0, %v528
  %v530 = vpop.f32.mrf.mxu0
  %531 = vdwg.mxu0
  %v532 = vadd.f32 %v282, %v529
  %v533 = vxor.u32 %v532, 2147483648
  %v534 = vmul.f32 %v533, 1.442695
  %v535 = vpow.pop %v534
  %v536 = vadd.f32 %v535, 1.0
  %v537 = vrcp.pop %v536
  %v538 = vmul.f32 1.0, %v537
  %540 = vrot.lane.b32.xlu0 %v529, 96
  %v541 = vpop.permute.xlu0 %540
  %v543 = vadd.f32 %v282, %v541
  %v544 = vadd.f32 %v529, %v428
  %546 = vrot.lane.b32.xlu0 %v544, 64
  %v547 = vpop.permute.xlu0 %546
  %v549 = vmul.f32 %v538, %v547
  %551 = vrot.lane.b32.xlu0 %v549, 64
  %v552 = vpop.permute.xlu0 %551
  %v554 = vadd.f32 %v543, %v552
  %v555 = vtanh.pop %v554
  %v556 = vsub.f32 1.0, %v538
  %558 = vrot.lane.b32.xlu0 %v555, 96
  %v559 = vpop.permute.xlu0 %558
  %v561 = vmul.f32 %v556, %v559
  %v562 = vmul.f32 %v538, %v452
  %v563 = vadd.f32 %v561, %v562
  %565 = vrot.lane.b32.xlu0 %v563, 96
  %v566 = vpop.permute.xlu0 %565
  %v567 = vsel %vm340, %v566, 0
  %569 = vmatprep.subr.mxu0 0.0
  %570 = vmatpush1.msra.mxu0 0.0
  %571 = vmatprep.subr.mxu0 0.0
  %572 = vmatpush1.msra.mxu0 0.0
  %573 = vmatprep.subr.mxu0 0.0
  %574 = vmatpush1.msra.mxu0 0.0
  %575 = vmatprep.subr.mxu0 0.0
  %576 = vmatpush1.msra.mxu0 0.0
  %577 = vmatprep.subr.mxu0 0.0
  %578 = vmatpush1.msra.mxu0 0.0
  %579 = vmatprep.subr.mxu0 0.0
  %580 = vmatpush1.msra.mxu0 0.0
  %581 = vmatprep.subr.mxu0 0.0
  %582 = vmatpush1.msra.mxu0 0.0
  %583 = vmatprep.subr.mxu0 0.0
  %584 = vmatpush1.msra.mxu0 0.0
  %585 = vmatprep.subr.mxu0 0.0
  %586 = vmatpush1.msra.mxu0 0.0
  %587 = vmatprep.subr.mxu0 0.0
  %588 = vmatpush1.msra.mxu0 0.0
  %589 = vmatprep.subr.mxu0 0.0
  %590 = vmatpush1.msra.mxu0 0.0
  %591 = vmatprep.subr.mxu0 0.0
  %592 = vmatpush1.msra.mxu0 0.0
  %593 = vmatprep.subr.mxu0 0.0
  %594 = vmatpush1.msra.mxu0 %v456
  %595 = vmatprep.subr.mxu0 0.0
  %596 = vmatpush1.msra.mxu0 %v455
  %597 = vmatprep.subr.mxu0 0.0
  %598 = vmatpush1.msra.mxu0 %v454
  %599 = vmatprep.subr.mxu0 0.0
  %600 = vmatpush1.msra.mxu0 %v453
  %601 = vmatprep.subr.mxu0 0.0
  %602 = vmatpush2.msra.mxu0 0.0
  %603 = vmatprep.subr.mxu0 0.0
  %604 = vmatpush2.msra.mxu0 0.0
  %605 = vmatprep.subr.mxu0 0.0
  %606 = vmatpush2.msra.mxu0 0.0
  %607 = vmatprep.subr.mxu0 0.0
  %608 = vmatpush2.msra.mxu0 0.0
  %609 = vmatprep.subr.mxu0 0.0
  %610 = vmatpush2.msra.mxu0 0.0
  %611 = vmatprep.subr.mxu0 0.0
  %612 = vmatpush2.msra.mxu0 0.0
  %613 = vmatprep.subr.mxu0 0.0
  %614 = vmatpush2.msra.mxu0 0.0
  %615 = vmatprep.subr.mxu0 0.0
  %616 = vmatpush2.msra.mxu0 0.0
  %617 = vmatprep.subr.mxu0 0.0
  %618 = vmatpush2.msra.mxu0 0.0
  %619 = vmatprep.subr.mxu0 0.0
  %620 = vmatpush2.msra.mxu0 0.0
  %621 = vmatprep.subr.mxu0 0.0
  %622 = vmatpush2.msra.mxu0 0.0
  %623 = vmatprep.subr.mxu0 0.0
  %624 = vmatpush2.msra.mxu0 0.0
  %625 = vmatprep.subr.mxu0 0.0
  %626 = vmatpush2.msra.mxu0 0.0
  %627 = vmatprep.subr.mxu0 0.0
  %628 = vmatpush2.msra.mxu0 0.0
  %629 = vmatprep.subr.mxu0 0.0
  %630 = vmatpush2.msra.mxu0 0.0
  %631 = vmatprep.subr.mxu0 0.0
  %632 = vmatpush2.msra.mxu0 0.0
  %633 = vmatprep.mubr.f32.mxu0 0.0
  %634 = vmatmul.mubr.f32.gmra.mxu0 %v567
  %v635 = vpop.f32.mrf.mxu0
  %v636 = vadd.f32 0.0, %v635
  %v637 = vpop.f32.mrf.mxu0
  %638 = vdwg.mxu0
  %v639 = vadd.f32 %v287, %v636
  %v640 = vxor.u32 %v639, 2147483648
  %v641 = vmul.f32 %v640, 1.442695
  %v642 = vpow.pop %v641
  %v643 = vadd.f32 %v642, 1.0
  %v644 = vrcp.pop %v643
  %v645 = vmul.f32 1.0, %v644
  %647 = vrot.lane.b32.xlu0 %v636, 96
  %v648 = vpop.permute.xlu0 %647
  %v650 = vadd.f32 %v287, %v648
  %v651 = vadd.f32 %v636, %v428
  %653 = vrot.lane.b32.xlu0 %v651, 64
  %v654 = vpop.permute.xlu0 %653
  %v656 = vmul.f32 %v645, %v654
  %658 = vrot.lane.b32.xlu0 %v656, 64
  %v659 = vpop.permute.xlu0 %658
  %v661 = vadd.f32 %v650, %v659
  %v662 = vtanh.pop %v661
  %v663 = vsub.f32 1.0, %v645
  %665 = vrot.lane.b32.xlu0 %v662, 96
  %v666 = vpop.permute.xlu0 %665
  %v668 = vmul.f32 %v663, %v666
  %v669 = vmul.f32 %v645, %v563
  %v670 = vadd.f32 %v668, %v669
  %672 = vrot.lane.b32.xlu0 %v670, 96
  %v673 = vpop.permute.xlu0 %672
  %v674 = vsel %vm340, %v673, 0
  %676 = vmatprep.subr.mxu0 0.0
  %677 = vmatpush1.msra.mxu0 0.0
  %678 = vmatprep.subr.mxu0 0.0
  %679 = vmatpush1.msra.mxu0 0.0
  %680 = vmatprep.subr.mxu0 0.0
  %681 = vmatpush1.msra.mxu0 0.0
  %682 = vmatprep.subr.mxu0 0.0
  %683 = vmatpush1.msra.mxu0 0.0
  %684 = vmatprep.subr.mxu0 0.0
  %685 = vmatpush1.msra.mxu0 0.0
  %686 = vmatprep.subr.mxu0 0.0
  %687 = vmatpush1.msra.mxu0 0.0
  %688 = vmatprep.subr.mxu0 0.0
  %689 = vmatpush1.msra.mxu0 0.0
  %690 = vmatprep.subr.mxu0 0.0
  %691 = vmatpush1.msra.mxu0 0.0
  %692 = vmatprep.subr.mxu0 0.0
  %693 = vmatpush1.msra.mxu0 0.0
  %694 = vmatprep.subr.mxu0 0.0
  %695 = vmatpush1.msra.mxu0 0.0
  %696 = vmatprep.subr.mxu0 0.0
  %697 = vmatpush1.msra.mxu0 0.0
  %698 = vmatprep.subr.mxu0 0.0
  %699 = vmatpush1.msra.mxu0 0.0
  %700 = vmatprep.subr.mxu0 0.0
  %701 = vmatpush1.msra.mxu0 %v456
  %702 = vmatprep.subr.mxu0 0.0
  %703 = vmatpush1.msra.mxu0 %v455
  %704 = vmatprep.subr.mxu0 0.0
  %705 = vmatpush1.msra.mxu0 %v454
  %706 = vmatprep.subr.mxu0 0.0
  %707 = vmatpush1.msra.mxu0 %v453
  %708 = vmatprep.subr.mxu0 0.0
  %709 = vmatpush2.msra.mxu0 0.0
  %710 = vmatprep.subr.mxu0 0.0
  %711 = vmatpush2.msra.mxu0 0.0
  %712 = vmatprep.subr.mxu0 0.0
  %713 = vmatpush2.msra.mxu0 0.0
  %714 = vmatprep.subr.mxu0 0.0
  %715 = vmatpush2.msra.mxu0 0.0
  %716 = vmatprep.subr.mxu0 0.0
  %717 = vmatpush2.msra.mxu0 0.0
  %718 = vmatprep.subr.mxu0 0.0
  %719 = vmatpush2.msra.mxu0 0.0
  %720 = vmatprep.subr.mxu0 0.0
  %721 = vmatpush2.msra.mxu0 0.0
  %722 = vmatprep.subr.mxu0 0.0
  %723 = vmatpush2.msra.mxu0 0.0
  %724 = vmatprep.subr.mxu0 0.0
  %725 = vmatpush2.msra.mxu0 0.0
  %726 = vmatprep.subr.mxu0 0.0
  %727 = vmatpush2.msra.mxu0 0.0
  %728 = vmatprep.subr.mxu0 0.0
  %729 = vmatpush2.msra.mxu0 0.0
  %730 = vmatprep.subr.mxu0 0.0
  %731 = vmatpush2.msra.mxu0 0.0
  %732 = vmatprep.subr.mxu0 0.0
  %733 = vmatpush2.msra.mxu0 0.0
  %734 = vmatprep.subr.mxu0 0.0
  %735 = vmatpush2.msra.mxu0 0.0
  %736 = vmatprep.subr.mxu0 0.0
  %737 = vmatpush2.msra.mxu0 0.0
  %738 = vmatprep.subr.mxu0 0.0
  %739 = vmatpush2.msra.mxu0 0.0
  %740 = vmatprep.mubr.f32.mxu0 0.0
  %741 = vmatmul.mubr.f32.gmra.mxu0 %v674
  %v742 = vpop.f32.mrf.mxu0
  %v743 = vadd.f32 0.0, %v742
  %v744 = vpop.f32.mrf.mxu0
  %745 = vdwg.mxu0
  %v746 = vadd.f32 %v292, %v743
  %v747 = vxor.u32 %v746, 2147483648
  %v748 = vmul.f32 %v747, 1.442695
  %v749 = vpow.pop %v748
  %v750 = vadd.f32 %v749, 1.0
  %v751 = vrcp.pop %v750
  %v752 = vmul.f32 1.0, %v751
  %754 = vrot.lane.b32.xlu0 %v743, 96
  %v755 = vpop.permute.xlu0 %754
  %v757 = vadd.f32 %v292, %v755
  %v758 = vadd.f32 %v743, %v428
  %760 = vrot.lane.b32.xlu0 %v758, 64
  %v761 = vpop.permute.xlu0 %760
  %v763 = vmul.f32 %v752, %v761
  %765 = vrot.lane.b32.xlu0 %v763, 64
  %v766 = vpop.permute.xlu0 %765
  %v768 = vadd.f32 %v757, %v766
  %v769 = vtanh.pop %v768
  %v770 = vsub.f32 1.0, %v752
  %772 = vrot.lane.b32.xlu0 %v769, 96
  %v773 = vpop.permute.xlu0 %772
  %v775 = vmul.f32 %v770, %v773
  %v776 = vmul.f32 %v752, %v670
  %v777 = vadd.f32 %v775, %v776
  %779 = vrot.lane.b32.xlu0 %v777, 96
  %v780 = vpop.permute.xlu0 %779
  %v781 = vsel %vm340, %v780, 0
  %783 = vmatprep.subr.mxu0 0.0
  %784 = vmatpush1.msra.mxu0 0.0
  %785 = vmatprep.subr.mxu0 0.0
  %786 = vmatpush1.msra.mxu0 0.0
  %787 = vmatprep.subr.mxu0 0.0
  %788 = vmatpush1.msra.mxu0 0.0
  %789 = vmatprep.subr.mxu0 0.0
  %790 = vmatpush1.msra.mxu0 0.0
  %791 = vmatprep.subr.mxu0 0.0
  %792 = vmatpush1.msra.mxu0 0.0
  %793 = vmatprep.subr.mxu0 0.0
  %794 = vmatpush1.msra.mxu0 0.0
  %795 = vmatprep.subr.mxu0 0.0
  %796 = vmatpush1.msra.mxu0 0.0
  %797 = vmatprep.subr.mxu0 0.0
  %798 = vmatpush1.msra.mxu0 0.0
  %799 = vmatprep.subr.mxu0 0.0
  %800 = vmatpush1.msra.mxu0 0.0
  %801 = vmatprep.subr.mxu0 0.0
  %802 = vmatpush1.msra.mxu0 0.0
  %803 = vmatprep.subr.mxu0 0.0
  %804 = vmatpush1.msra.mxu0 0.0
  %805 = vmatprep.subr.mxu0 0.0
  %806 = vmatpush1.msra.mxu0 0.0
  %807 = vmatprep.subr.mxu0 0.0
  %808 = vmatpush1.msra.mxu0 %v456
  %809 = vmatprep.subr.mxu0 0.0
  %810 = vmatpush1.msra.mxu0 %v455
  %811 = vmatprep.subr.mxu0 0.0
  %812 = vmatpush1.msra.mxu0 %v454
  %813 = vmatprep.subr.mxu0 0.0
  %814 = vmatpush1.msra.mxu0 %v453
  %815 = vmatprep.subr.mxu0 0.0
  %816 = vmatpush2.msra.mxu0 0.0
  %817 = vmatprep.subr.mxu0 0.0
  %818 = vmatpush2.msra.mxu0 0.0
  %819 = vmatprep.subr.mxu0 0.0
  %820 = vmatpush2.msra.mxu0 0.0
  %821 = vmatprep.subr.mxu0 0.0
  %822 = vmatpush2.msra.mxu0 0.0
  %823 = vmatprep.subr.mxu0 0.0
  %824 = vmatpush2.msra.mxu0 0.0
  %825 = vmatprep.subr.mxu0 0.0
  %826 = vmatpush2.msra.mxu0 0.0
  %827 = vmatprep.subr.mxu0 0.0
  %828 = vmatpush2.msra.mxu0 0.0
  %829 = vmatprep.subr.mxu0 0.0
  %830 = vmatpush2.msra.mxu0 0.0
  %831 = vmatprep.subr.mxu0 0.0
  %832 = vmatpush2.msra.mxu0 0.0
  %833 = vmatprep.subr.mxu0 0.0
  %834 = vmatpush2.msra.mxu0 0.0
  %835 = vmatprep.subr.mxu0 0.0
  %836 = vmatpush2.msra.mxu0 0.0
  %837 = vmatprep.subr.mxu0 0.0
  %838 = vmatpush2.msra.mxu0 0.0
  %839 = vmatprep.subr.mxu0 0.0
  %840 = vmatpush2.msra.mxu0 0.0
  %841 = vmatprep.subr.mxu0 0.0
  %842 = vmatpush2.msra.mxu0 0.0
  %843 = vmatprep.subr.mxu0 0.0
  %844 = vmatpush2.msra.mxu0 0.0
  %845 = vmatprep.subr.mxu0 0.0
  %846 = vmatpush2.msra.mxu0 0.0
  %847 = vmatprep.mubr.f32.mxu0 0.0
  %848 = vmatmul.mubr.f32.gmra.mxu0 %v781
  %v849 = vpop.f32.mrf.mxu0
  %v850 = vadd.f32 0.0, %v849
  %v851 = vpop.f32.mrf.mxu0
  %852 = vdwg.mxu0
  %v853 = vadd.f32 %v297, %v850
  %v854 = vxor.u32 %v853, 2147483648
  %v855 = vmul.f32 %v854, 1.442695
  %v856 = vpow.pop %v855
  %v857 = vadd.f32 %v856, 1.0
  %v858 = vrcp.pop %v857
  %v859 = vmul.f32 1.0, %v858
  %861 = vrot.lane.b32.xlu0 %v850, 96
  %v862 = vpop.permute.xlu0 %861
  %v864 = vadd.f32 %v297, %v862
  %v865 = vadd.f32 %v850, %v428
  %867 = vrot.lane.b32.xlu0 %v865, 64
  %v868 = vpop.permute.xlu0 %867
  %v870 = vmul.f32 %v859, %v868
  %872 = vrot.lane.b32.xlu0 %v870, 64
  %v873 = vpop.permute.xlu0 %872
  %v875 = vadd.f32 %v864, %v873
  %v876 = vtanh.pop %v875
  %v877 = vsub.f32 1.0, %v859
  %879 = vrot.lane.b32.xlu0 %v876, 96
  %v880 = vpop.permute.xlu0 %879
  %v882 = vmul.f32 %v877, %v880
  %v883 = vmul.f32 %v859, %v777
  %v884 = vadd.f32 %v882, %v883
  %886 = vrot.lane.b32.xlu0 %v884, 96
  %v887 = vpop.permute.xlu0 %886
  %v888 = vsel %vm340, %v887, 0
  %890 = vmatprep.subr.mxu0 0.0
  %891 = vmatpush1.msra.mxu0 0.0
  %892 = vmatprep.subr.mxu0 0.0
  %893 = vmatpush1.msra.mxu0 0.0
  %894 = vmatprep.subr.mxu0 0.0
  %895 = vmatpush1.msra.mxu0 0.0
  %896 = vmatprep.subr.mxu0 0.0
  %897 = vmatpush1.msra.mxu0 0.0
  %898 = vmatprep.subr.mxu0 0.0
  %899 = vmatpush1.msra.mxu0 0.0
  %900 = vmatprep.subr.mxu0 0.0
  %901 = vmatpush1.msra.mxu0 0.0
  %902 = vmatprep.subr.mxu0 0.0
  %903 = vmatpush1.msra.mxu0 0.0
  %904 = vmatprep.subr.mxu0 0.0
  %905 = vmatpush1.msra.mxu0 0.0
  %906 = vmatprep.subr.mxu0 0.0
  %907 = vmatpush1.msra.mxu0 0.0
  %908 = vmatprep.subr.mxu0 0.0
  %909 = vmatpush1.msra.mxu0 0.0
  %910 = vmatprep.subr.mxu0 0.0
  %911 = vmatpush1.msra.mxu0 0.0
  %912 = vmatprep.subr.mxu0 0.0
  %913 = vmatpush1.msra.mxu0 0.0
  %914 = vmatprep.subr.mxu0 0.0
  %915 = vmatpush1.msra.mxu0 %v456
  %916 = vmatprep.subr.mxu0 0.0
  %917 = vmatpush1.msra.mxu0 %v455
  %918 = vmatprep.subr.mxu0 0.0
  %919 = vmatpush1.msra.mxu0 %v454
  %920 = vmatprep.subr.mxu0 0.0
  %921 = vmatpush1.msra.mxu0 %v453
  %922 = vmatprep.subr.mxu0 0.0
  %923 = vmatpush2.msra.mxu0 0.0
  %924 = vmatprep.subr.mxu0 0.0
  %925 = vmatpush2.msra.mxu0 0.0
  %926 = vmatprep.subr.mxu0 0.0
  %927 = vmatpush2.msra.mxu0 0.0
  %928 = vmatprep.subr.mxu0 0.0
  %929 = vmatpush2.msra.mxu0 0.0
  %930 = vmatprep.subr.mxu0 0.0
  %931 = vmatpush2.msra.mxu0 0.0
  %932 = vmatprep.subr.mxu0 0.0
  %933 = vmatpush2.msra.mxu0 0.0
  %934 = vmatprep.subr.mxu0 0.0
  %935 = vmatpush2.msra.mxu0 0.0
  %936 = vmatprep.subr.mxu0 0.0
  %937 = vmatpush2.msra.mxu0 0.0
  %938 = vmatprep.subr.mxu0 0.0
  %939 = vmatpush2.msra.mxu0 0.0
  %940 = vmatprep.subr.mxu0 0.0
  %941 = vmatpush2.msra.mxu0 0.0
  %942 = vmatprep.subr.mxu0 0.0
  %943 = vmatpush2.msra.mxu0 0.0
  %944 = vmatprep.subr.mxu0 0.0
  %945 = vmatpush2.msra.mxu0 0.0
  %946 = vmatprep.subr.mxu0 0.0
  %947 = vmatpush2.msra.mxu0 0.0
  %948 = vmatprep.subr.mxu0 0.0
  %949 = vmatpush2.msra.mxu0 0.0
  %950 = vmatprep.subr.mxu0 0.0
  %951 = vmatpush2.msra.mxu0 0.0
  %952 = vmatprep.subr.mxu0 0.0
  %953 = vmatpush2.msra.mxu0 0.0
  %954 = vmatprep.mubr.f32.mxu0 0.0
  %955 = vmatmul.mubr.f32.gmra.mxu0 %v888
  %v956 = vpop.f32.mrf.mxu0
  %v957 = vadd.f32 0.0, %v956
  %v958 = vpop.f32.mrf.mxu0
  %959 = vdwg.mxu0
  %v960 = vadd.f32 %v302, %v957
  %v961 = vxor.u32 %v960, 2147483648
  %v962 = vmul.f32 %v961, 1.442695
  %v963 = vpow.pop %v962
  %v964 = vadd.f32 %v963, 1.0
  %v965 = vrcp.pop %v964
  %v966 = vmul.f32 1.0, %v965
  %968 = vrot.lane.b32.xlu0 %v957, 96
  %v969 = vpop.permute.xlu0 %968
  %v971 = vadd.f32 %v302, %v969
  %v972 = vadd.f32 %v957, %v428
  %974 = vrot.lane.b32.xlu0 %v972, 64
  %v975 = vpop.permute.xlu0 %974
  %v977 = vmul.f32 %v966, %v975
  %979 = vrot.lane.b32.xlu0 %v977, 64
  %v980 = vpop.permute.xlu0 %979
  %v982 = vadd.f32 %v971, %v980
  %v983 = vtanh.pop %v982
  %v984 = vsub.f32 1.0, %v966
  %986 = vrot.lane.b32.xlu0 %v983, 96
  %v987 = vpop.permute.xlu0 %986
  %v989 = vmul.f32 %v984, %v987
  %v990 = vmul.f32 %v966, %v884
  %v991 = vadd.f32 %v989, %v990
  %993 = vrot.lane.b32.xlu0 %v991, 96
  %v994 = vpop.permute.xlu0 %993
  %v995 = vsel %vm340, %v994, 0
  %997 = vmatprep.subr.mxu0 0.0
  %998 = vmatpush1.msra.mxu0 0.0
  %999 = vmatprep.subr.mxu0 0.0
  %1000 = vmatpush1.msra.mxu0 0.0
  %1001 = vmatprep.subr.mxu0 0.0
  %1002 = vmatpush1.msra.mxu0 0.0
  %1003 = vmatprep.subr.mxu0 0.0
  %1004 = vmatpush1.msra.mxu0 0.0
  %1005 = vmatprep.subr.mxu0 0.0
  %1006 = vmatpush1.msra.mxu0 0.0
  %1007 = vmatprep.subr.mxu0 0.0
  %1008 = vmatpush1.msra.mxu0 0.0
  %1009 = vmatprep.subr.mxu0 0.0
  %1010 = vmatpush1.msra.mxu0 0.0
  %1011 = vmatprep.subr.mxu0 0.0
  %1012 = vmatpush1.msra.mxu0 0.0
  %1013 = vmatprep.subr.mxu0 0.0
  %1014 = vmatpush1.msra.mxu0 0.0
  %1015 = vmatprep.subr.mxu0 0.0
  %1016 = vmatpush1.msra.mxu0 0.0
  %1017 = vmatprep.subr.mxu0 0.0
  %1018 = vmatpush1.msra.mxu0 0.0
  %1019 = vmatprep.subr.mxu0 0.0
  %1020 = vmatpush1.msra.mxu0 0.0
  %1021 = vmatprep.subr.mxu0 0.0
  %1022 = vmatpush1.msra.mxu0 %v456
  %1023 = vmatprep.subr.mxu0 0.0
  %1024 = vmatpush1.msra.mxu0 %v455
  %1025 = vmatprep.subr.mxu0 0.0
  %1026 = vmatpush1.msra.mxu0 %v454
  %1027 = vmatprep.subr.mxu0 0.0
  %1028 = vmatpush1.msra.mxu0 %v453
  %1029 = vmatprep.subr.mxu0 0.0
  %1030 = vmatpush2.msra.mxu0 0.0
  %1031 = vmatprep.subr.mxu0 0.0
  %1032 = vmatpush2.msra.mxu0 0.0
  %1033 = vmatprep.subr.mxu0 0.0
  %1034 = vmatpush2.msra.mxu0 0.0
  %1035 = vmatprep.subr.mxu0 0.0
  %1036 = vmatpush2.msra.mxu0 0.0
  %1037 = vmatprep.subr.mxu0 0.0
  %1038 = vmatpush2.msra.mxu0 0.0
  %1039 = vmatprep.subr.mxu0 0.0
  %1040 = vmatpush2.msra.mxu0 0.0
  %1041 = vmatprep.subr.mxu0 0.0
  %1042 = vmatpush2.msra.mxu0 0.0
  %1043 = vmatprep.subr.mxu0 0.0
  %1044 = vmatpush2.msra.mxu0 0.0
  %1045 = vmatprep.subr.mxu0 0.0
  %1046 = vmatpush2.msra.mxu0 0.0
  %1047 = vmatprep.subr.mxu0 0.0
  %1048 = vmatpush2.msra.mxu0 0.0
  %1049 = vmatprep.subr.mxu0 0.0
  %1050 = vmatpush2.msra.mxu0 0.0
  %1051 = vmatprep.subr.mxu0 0.0
  %1052 = vmatpush2.msra.mxu0 0.0
  %1053 = vmatprep.subr.mxu0 0.0
  %1054 = vmatpush2.msra.mxu0 0.0
  %1055 = vmatprep.subr.mxu0 0.0
  %1056 = vmatpush2.msra.mxu0 0.0
  %1057 = vmatprep.subr.mxu0 0.0
  %1058 = vmatpush2.msra.mxu0 0.0
  %1059 = vmatprep.subr.mxu0 0.0
  %1060 = vmatpush2.msra.mxu0 0.0
  %1061 = vmatprep.mubr.f32.mxu0 0.0
  %1062 = vmatmul.mubr.f32.gmra.mxu0 %v995
  %v1063 = vpop.f32.mrf.mxu0
  %v1064 = vadd.f32 0.0, %v1063
  %v1065 = vpop.f32.mrf.mxu0
  %1066 = vdwg.mxu0
  %v1067 = vadd.f32 %v307, %v1064
  %v1068 = vxor.u32 %v1067, 2147483648
  %v1069 = vmul.f32 %v1068, 1.442695
  %v1070 = vpow.pop %v1069
  %v1071 = vadd.f32 %v1070, 1.0
  %v1072 = vrcp.pop %v1071
  %v1073 = vmul.f32 1.0, %v1072
  %1075 = vrot.lane.b32.xlu0 %v1064, 96
  %v1076 = vpop.permute.xlu0 %1075
  %v1078 = vadd.f32 %v307, %v1076
  %v1079 = vadd.f32 %v1064, %v428
  %1081 = vrot.lane.b32.xlu0 %v1079, 64
  %v1082 = vpop.permute.xlu0 %1081
  %v1084 = vmul.f32 %v1073, %v1082
  %1086 = vrot.lane.b32.xlu0 %v1084, 64
  %v1087 = vpop.permute.xlu0 %1086
  %v1089 = vadd.f32 %v1078, %v1087
  %v1090 = vtanh.pop %v1089
  %v1091 = vsub.f32 1.0, %v1073
  %1093 = vrot.lane.b32.xlu0 %v1090, 96
  %v1094 = vpop.permute.xlu0 %1093
  %v1096 = vmul.f32 %v1091, %v1094
  %v1097 = vmul.f32 %v1073, %v991
  %v1098 = vadd.f32 %v1096, %v1097
  %1100 = vrot.lane.b32.xlu0 %v1098, 96
  %v1101 = vpop.permute.xlu0 %1100
  %v1102 = vsel %vm340, %v1101, 0
  %1104 = vmatprep.subr.mxu0 0.0
  %1105 = vmatpush1.msra.mxu0 0.0
  %1106 = vmatprep.subr.mxu0 0.0
  %1107 = vmatpush1.msra.mxu0 0.0
  %1108 = vmatprep.subr.mxu0 0.0
  %1109 = vmatpush1.msra.mxu0 0.0
  %1110 = vmatprep.subr.mxu0 0.0
  %1111 = vmatpush1.msra.mxu0 0.0
  %1112 = vmatprep.subr.mxu0 0.0
  %1113 = vmatpush1.msra.mxu0 0.0
  %1114 = vmatprep.subr.mxu0 0.0
  %1115 = vmatpush1.msra.mxu0 0.0
  %1116 = vmatprep.subr.mxu0 0.0
  %1117 = vmatpush1.msra.mxu0 0.0
  %1118 = vmatprep.subr.mxu0 0.0
  %1119 = vmatpush1.msra.mxu0 0.0
  %1120 = vmatprep.subr.mxu0 0.0
  %1121 = vmatpush1.msra.mxu0 0.0
  %1122 = vmatprep.subr.mxu0 0.0
  %1123 = vmatpush1.msra.mxu0 0.0
  %1124 = vmatprep.subr.mxu0 0.0
  %1125 = vmatpush1.msra.mxu0 0.0
  %1126 = vmatprep.subr.mxu0 0.0
  %1127 = vmatpush1.msra.mxu0 0.0
  %1128 = vmatprep.subr.mxu0 0.0
  %1129 = vmatpush1.msra.mxu0 %v456
  %1130 = vmatprep.subr.mxu0 0.0
  %1131 = vmatpush1.msra.mxu0 %v455
  %1132 = vmatprep.subr.mxu0 0.0
  %1133 = vmatpush1.msra.mxu0 %v454
  %1134 = vmatprep.subr.mxu0 0.0
  %1135 = vmatpush1.msra.mxu0 %v453
  %1136 = vmatprep.subr.mxu0 0.0
  %1137 = vmatpush2.msra.mxu0 0.0
  %1138 = vmatprep.subr.mxu0 0.0
  %1139 = vmatpush2.msra.mxu0 0.0
  %1140 = vmatprep.subr.mxu0 0.0
  %1141 = vmatpush2.msra.mxu0 0.0
  %1142 = vmatprep.subr.mxu0 0.0
  %1143 = vmatpush2.msra.mxu0 0.0
  %1144 = vmatprep.subr.mxu0 0.0
  %1145 = vmatpush2.msra.mxu0 0.0
  %1146 = vmatprep.subr.mxu0 0.0
  %1147 = vmatpush2.msra.mxu0 0.0
  %1148 = vmatprep.subr.mxu0 0.0
  %1149 = vmatpush2.msra.mxu0 0.0
  %1150 = vmatprep.subr.mxu0 0.0
  %1151 = vmatpush2.msra.mxu0 0.0
  %1152 = vmatprep.subr.mxu0 0.0
  %1153 = vmatpush2.msra.mxu0 0.0
  %1154 = vmatprep.subr.mxu0 0.0
  %1155 = vmatpush2.msra.mxu0 0.0
  %1156 = vmatprep.subr.mxu0 0.0
  %1157 = vmatpush2.msra.mxu0 0.0
  %1158 = vmatprep.subr.mxu0 0.0
  %1159 = vmatpush2.msra.mxu0 0.0
  %1160 = vmatprep.subr.mxu0 0.0
  %1161 = vmatpush2.msra.mxu0 0.0
  %1162 = vmatprep.subr.mxu0 0.0
  %1163 = vmatpush2.msra.mxu0 0.0
  %1164 = vmatprep.subr.mxu0 0.0
  %1165 = vmatpush2.msra.mxu0 0.0
  %1166 = vmatprep.subr.mxu0 0.0
  %1167 = vmatpush2.msra.mxu0 0.0
  %1168 = vmatprep.mubr.f32.mxu0 0.0
  %1169 = vmatmul.mubr.f32.gmra.mxu0 %v1102
  %v1170 = vpop.f32.mrf.mxu0
  %v1171 = vadd.f32 0.0, %v1170
  %v1172 = vpop.f32.mrf.mxu0
  %1173 = vdwg.mxu0
  %v1174 = vadd.f32 %v312, %v1171
  %v1175 = vxor.u32 %v1174, 2147483648
  %v1176 = vmul.f32 %v1175, 1.442695
  %v1177 = vpow.pop %v1176
  %v1178 = vadd.f32 %v1177, 1.0
  %v1179 = vrcp.pop %v1178
  %v1180 = vmul.f32 1.0, %v1179
  %1182 = vrot.lane.b32.xlu0 %v1171, 96
  %v1183 = vpop.permute.xlu0 %1182
  %v1185 = vadd.f32 %v312, %v1183
  %v1186 = vadd.f32 %v1171, %v428
  %1188 = vrot.lane.b32.xlu0 %v1186, 64
  %v1189 = vpop.permute.xlu0 %1188
  %v1191 = vmul.f32 %v1180, %v1189
  %1193 = vrot.lane.b32.xlu0 %v1191, 64
  %v1194 = vpop.permute.xlu0 %1193
  %v1196 = vadd.f32 %v1185, %v1194
  %v1197 = vtanh.pop %v1196
  %v1198 = vsub.f32 1.0, %v1180
  %1200 = vrot.lane.b32.xlu0 %v1197, 96
  %v1201 = vpop.permute.xlu0 %1200
  %v1203 = vmul.f32 %v1198, %v1201
  %v1204 = vmul.f32 %v1180, %v1098
  %v1205 = vadd.f32 %v1203, %v1204
  %1207 = vrot.lane.b32.xlu0 %v1205, 96
  %v1208 = vpop.permute.xlu0 %1207
  %v1209 = vsel %vm340, %v1208, 0
  %1211 = vmatprep.subr.mxu0 0.0
  %1212 = vmatpush1.msra.mxu0 0.0
  %1213 = vmatprep.subr.mxu0 0.0
  %1214 = vmatpush1.msra.mxu0 0.0
  %1215 = vmatprep.subr.mxu0 0.0
  %1216 = vmatpush1.msra.mxu0 0.0
  %1217 = vmatprep.subr.mxu0 0.0
  %1218 = vmatpush1.msra.mxu0 0.0
  %1219 = vmatprep.subr.mxu0 0.0
  %1220 = vmatpush1.msra.mxu0 0.0
  %1221 = vmatprep.subr.mxu0 0.0
  %1222 = vmatpush1.msra.mxu0 0.0
  %1223 = vmatprep.subr.mxu0 0.0
  %1224 = vmatpush1.msra.mxu0 0.0
  %1225 = vmatprep.subr.mxu0 0.0
  %1226 = vmatpush1.msra.mxu0 0.0
  %1227 = vmatprep.subr.mxu0 0.0
  %1228 = vmatpush1.msra.mxu0 0.0
  %1229 = vmatprep.subr.mxu0 0.0
  %1230 = vmatpush1.msra.mxu0 0.0
  %1231 = vmatprep.subr.mxu0 0.0
  %1232 = vmatpush1.msra.mxu0 0.0
  %1233 = vmatprep.subr.mxu0 0.0
  %1234 = vmatpush1.msra.mxu0 0.0
  %1235 = vmatprep.subr.mxu0 0.0
  %1236 = vmatpush1.msra.mxu0 %v456
  %1237 = vmatprep.subr.mxu0 0.0
  %1238 = vmatpush1.msra.mxu0 %v455
  %1239 = vmatprep.subr.mxu0 0.0
  %1240 = vmatpush1.msra.mxu0 %v454
  %1241 = vmatprep.subr.mxu0 0.0
  %1242 = vmatpush1.msra.mxu0 %v453
  %1243 = vmatprep.subr.mxu0 0.0
  %1244 = vmatpush2.msra.mxu0 0.0
  %1245 = vmatprep.subr.mxu0 0.0
  %1246 = vmatpush2.msra.mxu0 0.0
  %1247 = vmatprep.subr.mxu0 0.0
  %1248 = vmatpush2.msra.mxu0 0.0
  %1249 = vmatprep.subr.mxu0 0.0
  %1250 = vmatpush2.msra.mxu0 0.0
  %1251 = vmatprep.subr.mxu0 0.0
  %1252 = vmatpush2.msra.mxu0 0.0
  %1253 = vmatprep.subr.mxu0 0.0
  %1254 = vmatpush2.msra.mxu0 0.0
  %1255 = vmatprep.subr.mxu0 0.0
  %1256 = vmatpush2.msra.mxu0 0.0
  %1257 = vmatprep.subr.mxu0 0.0
  %1258 = vmatpush2.msra.mxu0 0.0
  %1259 = vmatprep.subr.mxu0 0.0
  %1260 = vmatpush2.msra.mxu0 0.0
  %1261 = vmatprep.subr.mxu0 0.0
  %1262 = vmatpush2.msra.mxu0 0.0
  %1263 = vmatprep.subr.mxu0 0.0
  %1264 = vmatpush2.msra.mxu0 0.0
  %1265 = vmatprep.subr.mxu0 0.0
  %1266 = vmatpush2.msra.mxu0 0.0
  %1267 = vmatprep.subr.mxu0 0.0
  %1268 = vmatpush2.msra.mxu0 0.0
  %1269 = vmatprep.subr.mxu0 0.0
  %1270 = vmatpush2.msra.mxu0 0.0
  %1271 = vmatprep.subr.mxu0 0.0
  %1272 = vmatpush2.msra.mxu0 0.0
  %1273 = vmatprep.subr.mxu0 0.0
  %1274 = vmatpush2.msra.mxu0 0.0
  %1275 = vmatprep.mubr.f32.mxu0 0.0
  %1276 = vmatmul.mubr.f32.gmra.mxu0 %v1209
  %v1277 = vpop.f32.mrf.mxu0
  %v1278 = vadd.f32 0.0, %v1277
  %v1279 = vpop.f32.mrf.mxu0
  %1280 = vdwg.mxu0
  %v1281 = vadd.f32 %v317, %v1278
  %v1282 = vxor.u32 %v1281, 2147483648
  %v1283 = vmul.f32 %v1282, 1.442695
  %v1284 = vpow.pop %v1283
  %v1285 = vadd.f32 %v1284, 1.0
  %v1286 = vrcp.pop %v1285
  %v1287 = vmul.f32 1.0, %v1286
  %1289 = vrot.lane.b32.xlu0 %v1278, 96
  %v1290 = vpop.permute.xlu0 %1289
  %v1292 = vadd.f32 %v317, %v1290
  %v1293 = vadd.f32 %v1278, %v428
  %1295 = vrot.lane.b32.xlu0 %v1293, 64
  %v1296 = vpop.permute.xlu0 %1295
  %v1298 = vmul.f32 %v1287, %v1296
  %1300 = vrot.lane.b32.xlu0 %v1298, 64
  %v1301 = vpop.permute.xlu0 %1300
  %v1303 = vadd.f32 %v1292, %v1301
  %v1304 = vtanh.pop %v1303
  %v1305 = vsub.f32 1.0, %v1287
  %1307 = vrot.lane.b32.xlu0 %v1304, 96
  %v1308 = vpop.permute.xlu0 %1307
  %v1310 = vmul.f32 %v1305, %v1308
  %v1311 = vmul.f32 %v1287, %v1205
  %v1312 = vadd.f32 %v1310, %v1311
  %1314 = vrot.lane.b32.xlu0 %v1312, 96
  %v1315 = vpop.permute.xlu0 %1314
  %v1316 = vsel %vm340, %v1315, 0
  %1318 = vmatprep.subr.mxu0 0.0
  %1319 = vmatpush1.msra.mxu0 0.0
  %1320 = vmatprep.subr.mxu0 0.0
  %1321 = vmatpush1.msra.mxu0 0.0
  %1322 = vmatprep.subr.mxu0 0.0
  %1323 = vmatpush1.msra.mxu0 0.0
  %1324 = vmatprep.subr.mxu0 0.0
  %1325 = vmatpush1.msra.mxu0 0.0
  %1326 = vmatprep.subr.mxu0 0.0
  %1327 = vmatpush1.msra.mxu0 0.0
  %1328 = vmatprep.subr.mxu0 0.0
  %1329 = vmatpush1.msra.mxu0 0.0
  %1330 = vmatprep.subr.mxu0 0.0
  %1331 = vmatpush1.msra.mxu0 0.0
  %1332 = vmatprep.subr.mxu0 0.0
  %1333 = vmatpush1.msra.mxu0 0.0
  %1334 = vmatprep.subr.mxu0 0.0
  %1335 = vmatpush1.msra.mxu0 0.0
  %1336 = vmatprep.subr.mxu0 0.0
  %1337 = vmatpush1.msra.mxu0 0.0
  %1338 = vmatprep.subr.mxu0 0.0
  %1339 = vmatpush1.msra.mxu0 0.0
  %1340 = vmatprep.subr.mxu0 0.0
  %1341 = vmatpush1.msra.mxu0 0.0
  %1342 = vmatprep.subr.mxu0 0.0
  %1343 = vmatpush1.msra.mxu0 %v456
  %1344 = vmatprep.subr.mxu0 0.0
  %1345 = vmatpush1.msra.mxu0 %v455
  %1346 = vmatprep.subr.mxu0 0.0
  %1347 = vmatpush1.msra.mxu0 %v454
  %1348 = vmatprep.subr.mxu0 0.0
  %1349 = vmatpush1.msra.mxu0 %v453
  %1350 = vmatprep.subr.mxu0 0.0
  %1351 = vmatpush2.msra.mxu0 0.0
  %1352 = vmatprep.subr.mxu0 0.0
  %1353 = vmatpush2.msra.mxu0 0.0
  %1354 = vmatprep.subr.mxu0 0.0
  %1355 = vmatpush2.msra.mxu0 0.0
  %1356 = vmatprep.subr.mxu0 0.0
  %1357 = vmatpush2.msra.mxu0 0.0
  %1358 = vmatprep.subr.mxu0 0.0
  %1359 = vmatpush2.msra.mxu0 0.0
  %1360 = vmatprep.subr.mxu0 0.0
  %1361 = vmatpush2.msra.mxu0 0.0
  %1362 = vmatprep.subr.mxu0 0.0
  %1363 = vmatpush2.msra.mxu0 0.0
  %1364 = vmatprep.subr.mxu0 0.0
  %1365 = vmatpush2.msra.mxu0 0.0
  %1366 = vmatprep.subr.mxu0 0.0
  %1367 = vmatpush2.msra.mxu0 0.0
  %1368 = vmatprep.subr.mxu0 0.0
  %1369 = vmatpush2.msra.mxu0 0.0
  %1370 = vmatprep.subr.mxu0 0.0
  %1371 = vmatpush2.msra.mxu0 0.0
  %1372 = vmatprep.subr.mxu0 0.0
  %1373 = vmatpush2.msra.mxu0 0.0
  %1374 = vmatprep.subr.mxu0 0.0
  %1375 = vmatpush2.msra.mxu0 0.0
  %1376 = vmatprep.subr.mxu0 0.0
  %1377 = vmatpush2.msra.mxu0 0.0
  %1378 = vmatprep.subr.mxu0 0.0
  %1379 = vmatpush2.msra.mxu0 0.0
  %1380 = vmatprep.subr.mxu0 0.0
  %1381 = vmatpush2.msra.mxu0 0.0
  %1382 = vmatprep.mubr.f32.mxu0 0.0
  %1383 = vmatmul.mubr.f32.gmra.mxu0 %v1316
  %v1384 = vpop.f32.mrf.mxu0
  %v1385 = vadd.f32 0.0, %v1384
  %v1386 = vpop.f32.mrf.mxu0
  %1387 = vdwg.mxu0
  %v1388 = vadd.f32 %v322, %v1385
  %v1389 = vxor.u32 %v1388, 2147483648
  %v1390 = vmul.f32 %v1389, 1.442695
  %v1391 = vpow.pop %v1390
  %v1392 = vadd.f32 %v1391, 1.0
  %v1393 = vrcp.pop %v1392
  %v1394 = vmul.f32 1.0, %v1393
  %1396 = vrot.lane.b32.xlu0 %v1385, 96
  %v1397 = vpop.permute.xlu0 %1396
  %v1399 = vadd.f32 %v322, %v1397
  %v1400 = vadd.f32 %v1385, %v428
  %1402 = vrot.lane.b32.xlu0 %v1400, 64
  %v1403 = vpop.permute.xlu0 %1402
  %v1405 = vmul.f32 %v1394, %v1403
  %1407 = vrot.lane.b32.xlu0 %v1405, 64
  %v1408 = vpop.permute.xlu0 %1407
  %v1410 = vadd.f32 %v1399, %v1408
  %v1411 = vtanh.pop %v1410
  %v1412 = vsub.f32 1.0, %v1394
  %1414 = vrot.lane.b32.xlu0 %v1411, 96
  %v1415 = vpop.permute.xlu0 %1414
  %v1417 = vmul.f32 %v1412, %v1415
  %v1418 = vmul.f32 %v1394, %v1312
  %v1419 = vadd.f32 %v1417, %v1418
  %1421 = vrot.lane.b32.xlu0 %v1419, 96
  %v1422 = vpop.permute.xlu0 %1421
  %v1423 = vsel %vm340, %v1422, 0
  %1425 = vmatprep.subr.mxu0 0.0
  %1426 = vmatpush1.msra.mxu0 0.0
  %1427 = vmatprep.subr.mxu0 0.0
  %1428 = vmatpush1.msra.mxu0 0.0
  %1429 = vmatprep.subr.mxu0 0.0
  %1430 = vmatpush1.msra.mxu0 0.0
  %1431 = vmatprep.subr.mxu0 0.0
  %1432 = vmatpush1.msra.mxu0 0.0
  %1433 = vmatprep.subr.mxu0 0.0
  %1434 = vmatpush1.msra.mxu0 0.0
  %1435 = vmatprep.subr.mxu0 0.0
  %1436 = vmatpush1.msra.mxu0 0.0
  %1437 = vmatprep.subr.mxu0 0.0
  %1438 = vmatpush1.msra.mxu0 0.0
  %1439 = vmatprep.subr.mxu0 0.0
  %1440 = vmatpush1.msra.mxu0 0.0
  %1441 = vmatprep.subr.mxu0 0.0
  %1442 = vmatpush1.msra.mxu0 0.0
  %1443 = vmatprep.subr.mxu0 0.0
  %1444 = vmatpush1.msra.mxu0 0.0
  %1445 = vmatprep.subr.mxu0 0.0
  %1446 = vmatpush1.msra.mxu0 0.0
  %1447 = vmatprep.subr.mxu0 0.0
  %1448 = vmatpush1.msra.mxu0 0.0
  %1449 = vmatprep.subr.mxu0 0.0
  %1450 = vmatpush1.msra.mxu0 %v456
  %1451 = vmatprep.subr.mxu0 0.0
  %1452 = vmatpush1.msra.mxu0 %v455
  %1453 = vmatprep.subr.mxu0 0.0
  %1454 = vmatpush1.msra.mxu0 %v454
  %1455 = vmatprep.subr.mxu0 0.0
  %1456 = vmatpush1.msra.mxu0 %v453
  %1457 = vmatprep.subr.mxu0 0.0
  %1458 = vmatpush2.msra.mxu0 0.0
  %1459 = vmatprep.subr.mxu0 0.0
  %1460 = vmatpush2.msra.mxu0 0.0
  %1461 = vmatprep.subr.mxu0 0.0
  %1462 = vmatpush2.msra.mxu0 0.0
  %1463 = vmatprep.subr.mxu0 0.0
  %1464 = vmatpush2.msra.mxu0 0.0
  %1465 = vmatprep.subr.mxu0 0.0
  %1466 = vmatpush2.msra.mxu0 0.0
  %1467 = vmatprep.subr.mxu0 0.0
  %1468 = vmatpush2.msra.mxu0 0.0
  %1469 = vmatprep.subr.mxu0 0.0
  %1470 = vmatpush2.msra.mxu0 0.0
  %1471 = vmatprep.subr.mxu0 0.0
  %1472 = vmatpush2.msra.mxu0 0.0
  %1473 = vmatprep.subr.mxu0 0.0
  %1474 = vmatpush2.msra.mxu0 0.0
  %1475 = vmatprep.subr.mxu0 0.0
  %1476 = vmatpush2.msra.mxu0 0.0
  %1477 = vmatprep.subr.mxu0 0.0
  %1478 = vmatpush2.msra.mxu0 0.0
  %1479 = vmatprep.subr.mxu0 0.0
  %1480 = vmatpush2.msra.mxu0 0.0
  %1481 = vmatprep.subr.mxu0 0.0
  %1482 = vmatpush2.msra.mxu0 0.0
  %1483 = vmatprep.subr.mxu0 0.0
  %1484 = vmatpush2.msra.mxu0 0.0
  %1485 = vmatprep.subr.mxu0 0.0
  %1486 = vmatpush2.msra.mxu0 0.0
  %1487 = vmatprep.subr.mxu0 0.0
  %1488 = vmatpush2.msra.mxu0 0.0
  %1489 = vmatprep.mubr.f32.mxu0 0.0
  %1490 = vmatmul.mubr.f32.gmra.mxu0 %v1423
  %v1491 = vpop.f32.mrf.mxu0
  %v1492 = vadd.f32 0.0, %v1491
  %v1493 = vpop.f32.mrf.mxu0
  %1494 = vdwg.mxu0
  %v1495 = vadd.f32 %v327, %v1492
  %v1496 = vxor.u32 %v1495, 2147483648
  %v1497 = vmul.f32 %v1496, 1.442695
  %v1498 = vpow.pop %v1497
  %v1499 = vadd.f32 %v1498, 1.0
  %v1500 = vrcp.pop %v1499
  %v1501 = vmul.f32 1.0, %v1500
  %1503 = vrot.lane.b32.xlu0 %v1492, 96
  %v1504 = vpop.permute.xlu0 %1503
  %v1506 = vadd.f32 %v327, %v1504
  %v1507 = vadd.f32 %v1492, %v428
  %1509 = vrot.lane.b32.xlu0 %v1507, 64
  %v1510 = vpop.permute.xlu0 %1509
  %v1512 = vmul.f32 %v1501, %v1510
  %1514 = vrot.lane.b32.xlu0 %v1512, 64
  %v1515 = vpop.permute.xlu0 %1514
  %v1517 = vadd.f32 %v1506, %v1515
  %v1518 = vtanh.pop %v1517
  %v1519 = vsub.f32 1.0, %v1501
  %1521 = vrot.lane.b32.xlu0 %v1518, 96
  %v1522 = vpop.permute.xlu0 %1521
  %v1524 = vmul.f32 %v1519, %v1522
  %v1525 = vmul.f32 %v1501, %v1419
  %v1526 = vadd.f32 %v1524, %v1525
  %1528 = vrot.lane.b32.xlu0 %v1526, 96
  %v1529 = vpop.permute.xlu0 %1528
  %v1530 = vsel %vm340, %v1529, 0
  %1532 = vmatprep.subr.mxu0 0.0
  %1533 = vmatpush1.msra.mxu0 0.0
  %1534 = vmatprep.subr.mxu0 0.0
  %1535 = vmatpush1.msra.mxu0 0.0
  %1536 = vmatprep.subr.mxu0 0.0
  %1537 = vmatpush1.msra.mxu0 0.0
  %1538 = vmatprep.subr.mxu0 0.0
  %1539 = vmatpush1.msra.mxu0 0.0
  %1540 = vmatprep.subr.mxu0 0.0
  %1541 = vmatpush1.msra.mxu0 0.0
  %1542 = vmatprep.subr.mxu0 0.0
  %1543 = vmatpush1.msra.mxu0 0.0
  %1544 = vmatprep.subr.mxu0 0.0
  %1545 = vmatpush1.msra.mxu0 0.0
  %1546 = vmatprep.subr.mxu0 0.0
  %1547 = vmatpush1.msra.mxu0 0.0
  %1548 = vmatprep.subr.mxu0 0.0
  %1549 = vmatpush1.msra.mxu0 0.0
  %1550 = vmatprep.subr.mxu0 0.0
  %1551 = vmatpush1.msra.mxu0 0.0
  %1552 = vmatprep.subr.mxu0 0.0
  %1553 = vmatpush1.msra.mxu0 0.0
  %1554 = vmatprep.subr.mxu0 0.0
  %1555 = vmatpush1.msra.mxu0 0.0
  %1556 = vmatprep.subr.mxu0 0.0
  %1557 = vmatpush1.msra.mxu0 %v456
  %1558 = vmatprep.subr.mxu0 0.0
  %1559 = vmatpush1.msra.mxu0 %v455
  %1560 = vmatprep.subr.mxu0 0.0
  %1561 = vmatpush1.msra.mxu0 %v454
  %1562 = vmatprep.subr.mxu0 0.0
  %1563 = vmatpush1.msra.mxu0 %v453
  %1564 = vmatprep.subr.mxu0 0.0
  %1565 = vmatpush2.msra.mxu0 0.0
  %1566 = vmatprep.subr.mxu0 0.0
  %1567 = vmatpush2.msra.mxu0 0.0
  %1568 = vmatprep.subr.mxu0 0.0
  %1569 = vmatpush2.msra.mxu0 0.0
  %1570 = vmatprep.subr.mxu0 0.0
  %1571 = vmatpush2.msra.mxu0 0.0
  %1572 = vmatprep.subr.mxu0 0.0
  %1573 = vmatpush2.msra.mxu0 0.0
  %1574 = vmatprep.subr.mxu0 0.0
  %1575 = vmatpush2.msra.mxu0 0.0
  %1576 = vmatprep.subr.mxu0 0.0
  %1577 = vmatpush2.msra.mxu0 0.0
  %1578 = vmatprep.subr.mxu0 0.0
  %1579 = vmatpush2.msra.mxu0 0.0
  %1580 = vmatprep.subr.mxu0 0.0
  %1581 = vmatpush2.msra.mxu0 0.0
  %1582 = vmatprep.subr.mxu0 0.0
  %1583 = vmatpush2.msra.mxu0 0.0
  %1584 = vmatprep.subr.mxu0 0.0
  %1585 = vmatpush2.msra.mxu0 0.0
  %1586 = vmatprep.subr.mxu0 0.0
  %1587 = vmatpush2.msra.mxu0 0.0
  %1588 = vmatprep.subr.mxu0 0.0
  %1589 = vmatpush2.msra.mxu0 0.0
  %1590 = vmatprep.subr.mxu0 0.0
  %1591 = vmatpush2.msra.mxu0 0.0
  %1592 = vmatprep.subr.mxu0 0.0
  %1593 = vmatpush2.msra.mxu0 0.0
  %1594 = vmatprep.subr.mxu0 0.0
  %1595 = vmatpush2.msra.mxu0 0.0
  %1596 = vmatprep.mubr.f32.mxu0 0.0
  %1597 = vmatmul.mubr.f32.gmra.mxu0 %v1530
  %v1598 = vpop.f32.mrf.mxu0
  %v1599 = vadd.f32 0.0, %v1598
  %v1600 = vpop.f32.mrf.mxu0
  %1601 = vdwg.mxu0
  %v1602 = vadd.f32 %v332, %v1599
  %v1603 = vxor.u32 %v1602, 2147483648
  %v1604 = vmul.f32 %v1603, 1.442695
  %v1605 = vpow.pop %v1604
  %v1606 = vadd.f32 %v1605, 1.0
  %v1607 = vrcp.pop %v1606
  %v1608 = vmul.f32 1.0, %v1607
  %1610 = vrot.lane.b32.xlu0 %v1599, 96
  %v1611 = vpop.permute.xlu0 %1610
  %v1613 = vadd.f32 %v332, %v1611
  %v1614 = vadd.f32 %v1599, %v428
  %1616 = vrot.lane.b32.xlu0 %v1614, 64
  %v1617 = vpop.permute.xlu0 %1616
  %v1619 = vmul.f32 %v1608, %v1617
  %1621 = vrot.lane.b32.xlu0 %v1619, 64
  %v1622 = vpop.permute.xlu0 %1621
  %v1624 = vadd.f32 %v1613, %v1622
  %v1625 = vtanh.pop %v1624
  %v1626 = vsub.f32 1.0, %v1608
  %1628 = vrot.lane.b32.xlu0 %v1625, 96
  %v1629 = vpop.permute.xlu0 %1628
  %v1631 = vmul.f32 %v1626, %v1629
  %v1632 = vmul.f32 %v1608, %v1526
  %v1633 = vadd.f32 %v1631, %v1632
  %v1634 = vld [vmem:[%s8] sm:$0xff]
  %v1635 = vld [vmem:[%s8 + $0x8] sm:$0xff]
  %v1636 = vld [vmem:[%s8 + $0x10] sm:$0xff]
  %v1637 = vld [vmem:[%s8 + $0x18] sm:$0xff]
  %v1638 = vld [vmem:[#allocation2] sm:$0x1]
  %v1640 = vlaneseq
  %v1641 = vshrl.u32 %v1640, 7
  %v1642 = vsub.s32 0, %v1641
  %v1643 = vrot.slane %v1638, %v1642
  %1646 = vrot.lane.b32.xlu0 %v1633, 96
  %v1647 = vpop.permute.xlu0 %1646
  %v1648 = vsel %vm340, %v1647, 0
  %1650 = vmatprep.subr.mxu0 0.0
  %1651 = vmatpush1.msra.mxu0 0.0
  %1652 = vmatprep.subr.mxu0 0.0
  %1653 = vmatpush1.msra.mxu0 0.0
  %1654 = vmatprep.subr.mxu0 0.0
  %1655 = vmatpush1.msra.mxu0 0.0
  %1656 = vmatprep.subr.mxu0 0.0
  %1657 = vmatpush1.msra.mxu0 0.0
  %1658 = vmatprep.subr.mxu0 0.0
  %1659 = vmatpush1.msra.mxu0 0.0
  %1660 = vmatprep.subr.mxu0 0.0
  %1661 = vmatpush1.msra.mxu0 0.0
  %1662 = vmatprep.subr.mxu0 0.0
  %1663 = vmatpush1.msra.mxu0 0.0
  %1664 = vmatprep.subr.mxu0 0.0
  %1665 = vmatpush1.msra.mxu0 0.0
  %1666 = vmatprep.subr.mxu0 0.0
  %1667 = vmatpush1.msra.mxu0 0.0
  %1668 = vmatprep.subr.mxu0 0.0
  %1669 = vmatpush1.msra.mxu0 0.0
  %1670 = vmatprep.subr.mxu0 0.0
  %1671 = vmatpush1.msra.mxu0 0.0
  %1672 = vmatprep.subr.mxu0 0.0
  %1673 = vmatpush1.msra.mxu0 0.0
  %1674 = vmatprep.subr.mxu0 0.0
  %1675 = vmatpush1.msra.mxu0 %v1637
  %1676 = vmatprep.subr.mxu0 0.0
  %1677 = vmatpush1.msra.mxu0 %v1636
  %1678 = vmatprep.subr.mxu0 0.0
  %1679 = vmatpush1.msra.mxu0 %v1635
  %1680 = vmatprep.subr.mxu0 0.0
  %1681 = vmatpush1.msra.mxu0 %v1634
  %1682 = vmatprep.subr.mxu0 0.0
  %1683 = vmatpush2.msra.mxu0 0.0
  %1684 = vmatprep.subr.mxu0 0.0
  %1685 = vmatpush2.msra.mxu0 0.0
  %1686 = vmatprep.subr.mxu0 0.0
  %1687 = vmatpush2.msra.mxu0 0.0
  %1688 = vmatprep.subr.mxu0 0.0
  %1689 = vmatpush2.msra.mxu0 0.0
  %1690 = vmatprep.subr.mxu0 0.0
  %1691 = vmatpush2.msra.mxu0 0.0
  %1692 = vmatprep.subr.mxu0 0.0
  %1693 = vmatpush2.msra.mxu0 0.0
  %1694 = vmatprep.subr.mxu0 0.0
  %1695 = vmatpush2.msra.mxu0 0.0
  %1696 = vmatprep.subr.mxu0 0.0
  %1697 = vmatpush2.msra.mxu0 0.0
  %1698 = vmatprep.subr.mxu0 0.0
  %1699 = vmatpush2.msra.mxu0 0.0
  %1700 = vmatprep.subr.mxu0 0.0
  %1701 = vmatpush2.msra.mxu0 0.0
  %1702 = vmatprep.subr.mxu0 0.0
  %1703 = vmatpush2.msra.mxu0 0.0
  %1704 = vmatprep.subr.mxu0 0.0
  %1705 = vmatpush2.msra.mxu0 0.0
  %1706 = vmatprep.subr.mxu0 0.0
  %1707 = vmatpush2.msra.mxu0 0.0
  %1708 = vmatprep.subr.mxu0 0.0
  %1709 = vmatpush2.msra.mxu0 0.0
  %1710 = vmatprep.subr.mxu0 0.0
  %1711 = vmatpush2.msra.mxu0 0.0
  %1712 = vmatprep.subr.mxu0 0.0
  %1713 = vmatpush2.msra.mxu0 0.0
  %1714 = vmatprep.mubr.f32.mxu0 0.0
  %1715 = vmatmul.mubr.f32.gmra.mxu0 %v460
  %v1716 = vpop.f32.mrf.mxu0
  %v1717 = vadd.f32 %v1643, %v1716
  %v1718 = vpop.f32.mrf.mxu0
  %1719 = vmatprep.mubr.f32.mxu0 0.0
  %1720 = vmatmul.mubr.f32.gmra.mxu0 %v567
  %v1721 = vpop.f32.mrf.mxu0
  %v1722 = vadd.f32 %v1643, %v1721
  %v1723 = vpop.f32.mrf.mxu0
  %1724 = vmatprep.mubr.f32.mxu0 0.0
  %1725 = vmatmul.mubr.f32.gmra.mxu0 %v674
  %v1726 = vpop.f32.mrf.mxu0
  %v1727 = vadd.f32 %v1643, %v1726
  %v1728 = vpop.f32.mrf.mxu0
  %1729 = vmatprep.mubr.f32.mxu0 0.0
  %1730 = vmatmul.mubr.f32.gmra.mxu0 %v781
  %v1731 = vpop.f32.mrf.mxu0
  %v1732 = vadd.f32 %v1643, %v1731
  %v1733 = vpop.f32.mrf.mxu0
  %1734 = vmatprep.mubr.f32.mxu0 0.0
  %1735 = vmatmul.mubr.f32.gmra.mxu0 %v888
  %v1736 = vpop.f32.mrf.mxu0
  %v1737 = vadd.f32 %v1643, %v1736
  %v1738 = vpop.f32.mrf.mxu0
  %1739 = vmatprep.mubr.f32.mxu0 0.0
  %1740 = vmatmul.mubr.f32.gmra.mxu0 %v995
  %v1741 = vpop.f32.mrf.mxu0
  %v1742 = vadd.f32 %v1643, %v1741
  %v1743 = vpop.f32.mrf.mxu0
  %1744 = vmatprep.mubr.f32.mxu0 0.0
  %1745 = vmatmul.mubr.f32.gmra.mxu0 %v1102
  %v1746 = vpop.f32.mrf.mxu0
  %v1747 = vadd.f32 %v1643, %v1746
  %v1748 = vpop.f32.mrf.mxu0
  %1749 = vmatprep.mubr.f32.mxu0 0.0
  %1750 = vmatmul.mubr.f32.gmra.mxu0 %v1209
  %v1751 = vpop.f32.mrf.mxu0
  %v1752 = vadd.f32 %v1643, %v1751
  %v1753 = vpop.f32.mrf.mxu0
  %1754 = vmatprep.mubr.f32.mxu0 0.0
  %1755 = vmatmul.mubr.f32.gmra.mxu0 %v1316
  %v1756 = vpop.f32.mrf.mxu0
  %v1757 = vadd.f32 %v1643, %v1756
  %v1758 = vpop.f32.mrf.mxu0
  %1759 = vmatprep.mubr.f32.mxu0 0.0
  %1760 = vmatmul.mubr.f32.gmra.mxu0 %v1423
  %v1761 = vpop.f32.mrf.mxu0
  %v1762 = vadd.f32 %v1643, %v1761
  %v1763 = vpop.f32.mrf.mxu0
  %1764 = vmatprep.mubr.f32.mxu0 0.0
  %1765 = vmatmul.mubr.f32.gmra.mxu0 %v1530
  %v1766 = vpop.f32.mrf.mxu0
  %v1767 = vadd.f32 %v1643, %v1766
  %v1768 = vpop.f32.mrf.mxu0
  %1769 = vmatprep.mubr.f32.mxu0 0.0
  %1770 = vmatmul.mubr.f32.gmra.mxu0 %v1648
  %v1771 = vpop.f32.mrf.mxu0
  %v1772 = vadd.f32 %v1643, %v1771
  %v1773 = vpop.f32.mrf.mxu0
  %1774 = vdwg.mxu0
  %vm1775 = vcmask 7168
  %1776 = vst.msk [vmem:[%s10] sm:$0xff] %vm1775, %v1717
  %1777 = vst.msk [vmem:[%s10 + $0x8] sm:$0xff] %vm1775, %v1722
  %1778 = vst.msk [vmem:[%s10 + $0x10] sm:$0xff] %vm1775, %v1727
  %1779 = vst.msk [vmem:[%s10 + $0x18] sm:$0xff] %vm1775, %v1732
  %1780 = vst.msk [vmem:[%s10 + $0x20] sm:$0xff] %vm1775, %v1737
  %1781 = vst.msk [vmem:[%s10 + $0x28] sm:$0xff] %vm1775, %v1742
  %1782 = vst.msk [vmem:[%s10 + $0x30] sm:$0xff] %vm1775, %v1747
  %1783 = vst.msk [vmem:[%s10 + $0x38] sm:$0xff] %vm1775, %v1752
  %1784 = vst.msk [vmem:[%s10 + $0x40] sm:$0xff] %vm1775, %v1757
  %1785 = vst.msk [vmem:[%s10 + $0x48] sm:$0xff] %vm1775, %v1762
  %1786 = vst.msk [vmem:[%s10 + $0x50] sm:$0xff] %vm1775, %v1767
  %1787 = vst.msk [vmem:[%s10 + $0x58] sm:$0xff] %vm1775, %v1772
  // Predicated region
  $region42: #{tpu_custom_call.1} parent=0 // pred_check
    _
  $region43: #{tpu_custom_call.1} parent=0 // pred_check_branch
    %1789 = sbr.rel (0) target = $region45
  $region44: #{tpu_custom_call.1} parent=0 // pred_region
    _
  $region45: #{tpu_custom_call.1} parent=0 // pred_fallthru
    _
  // Predicated region
  $region46: #{tpu_custom_call.1} parent=0 // pred_check
    _
  $region47: #{tpu_custom_call.1} parent=0 // pred_check_branch
    %1791 = sbr.rel (0) target = $region49
  $region48: #{tpu_custom_call.1} parent=0 // pred_region
    _
  $region49: #{tpu_custom_call.1} parent=0 // pred_fallthru
    _

</llo_original>
